<compile_context>
chip_gen: v6e
topology: v6e:2x2x1
jax: 0.10.0
libtpu: 0.0.40
codegen_flags: <defaults>
</compile_context>

<pallas_src>
import functools

import jax
import jax.numpy as jnp
from jax import lax
from jax.experimental import pallas as pl
from jax.experimental.pallas import tpu as pltpu

BN_EPS = 1e-5


# ----------------------------------------------------------------------------
# Kernel: one (image, row-tile) per grid step.
# ----------------------------------------------------------------------------
def _bottleneck_kernel(xt_ref, xm_ref, xb_ref, w1_ref, b1_ref, v_ref, b2_ref,
                       o_ref, *, add, th, width, c2, pack_out, compute_dtype):
    w = width
    c1 = xm_ref.shape[-1]
    t = pl.program_id(1)
    n_t = pl.num_programs(1)

    # ---- assemble the (th+2)-row halo block of the input --------------------
    xh = jnp.concatenate([xt_ref[0], xm_ref[0], xb_ref[0]], axis=0)  # (th+2,W,C1)
    rows = (th + 2) * w
    x2d = xh.reshape(rows, c1)

    # ---- cv1: 1x1 conv == channel matmul + folded-BN bias + SiLU ------------
    h1 = jnp.dot(x2d.astype(compute_dtype), w1_ref[...],
                 preferred_element_type=jnp.float32)
    h1 = h1 + b1_ref[...]                       # (rows, Cm) + (1, Cm)
    h1 = h1 * jax.nn.sigmoid(h1)                # SiLU in f32

    # Halo rows that fall outside the image are conv padding for cv2: zero
    # them (cv1 of a zero input row is SiLU(bias) != 0, the padding applies to
    # cv1's output).
    ridx = lax.broadcasted_iota(jnp.int32, (rows, 1), 0)
    pad_row = jnp.logical_or(
        jnp.logical_and(t == 0, ridx < w),
        jnp.logical_and(t == n_t - 1, ridx >= (th + 1) * w))
    h1 = jnp.where(pad_row, 0.0, h1).astype(compute_dtype)

    # ---- cv2: 3x3 conv as ONE matmul -----------------------------------------
    # h1 rows are the row-major flattened (row, col) positions, so a dy shift
    # is a contiguous row-offset slice.  K = 3*Cm (dy taps), N = 3*C2 (dx
    # taps); the dx shift is applied to the small result below.
    m = th * w
    y = jnp.concatenate([h1[0:m], h1[w:w + m], h1[2 * w:2 * w + m]], axis=1)
    g = jnp.dot(y, v_ref[...], preferred_element_type=jnp.float32)  # (m, 3*C2)

    g0 = g[:, 0:c2].reshape(th, w, c2)            # taps needing h1[.., col-1]
    g1 = g[:, c2:2 * c2].reshape(th, w, c2)       # centre column taps
    g2 = g[:, 2 * c2:3 * c2].reshape(th, w, c2)   # taps needing h1[.., col+1]
    zero_col = jnp.zeros((th, 1, c2), jnp.float32)
    left = jnp.concatenate([zero_col, g0[:, :w - 1, :]], axis=1)
    right = jnp.concatenate([g2[:, 1:, :], zero_col], axis=1)

    acc = g1 + left + right + b2_ref[...]         # + (1, C2) folded-BN bias
    h2 = acc * jax.nn.sigmoid(acc)                # SiLU in f32

    if add:                                       # static residual flag
        h2 = h2 + xm_ref[0].astype(jnp.float32)

    if pack_out:
        # Lane-dense store: last dim presented to the store is W*C2 (>= 128).
        packed = jnp.concatenate([h2[:, i, :] for i in range(w)], axis=1)
        o_ref[0] = packed.astype(o_ref.dtype)
    else:
        o_ref[0] = h2.astype(o_ref.dtype)


def _pick_tile_h(h, w, target_rows=2048):
    """Largest multiple-of-8 divisor of h keeping ~target_rows matmul rows."""
    cands = [d for d in range(8, h + 1, 8) if h % d == 0]
    if not cands:
        return h
    best = cands[0]
    for d in cands:
        if d * w <= target_rows:
            best = d
    return best


def bottleneck_pallas_nhwc(x_nhwc, w1, b1, v, b2, *, add, tile_h=None,
                           compute_dtype=jnp.bfloat16):
    """x_nhwc: (N,H,W,C1); w1: (C1,Cm); b1: (1,Cm); v: (3*Cm,3*C2); b2: (1,C2)."""
    N, H, W, C1 = x_nhwc.shape
    Cm = w1.shape[1]
    C2 = b2.shape[1]
    th = tile_h if tile_h is not None else _pick_tile_h(H, W)
    assert H % th == 0 and (th % 8 == 0 or th == H), (H, th)
    T = H // th

    # Present a lane-dense output when the channel count alone is < 128.
    pack_out = (C2 < 128) and ((W * C2) % 128 == 0) and (W <= 128)

    w1c = w1.astype(compute_dtype)
    vc = v.astype(compute_dtype)
    b1f = b1.astype(jnp.float32)
    b2f = b2.astype(jnp.float32)

    kernel = functools.partial(_bottleneck_kernel, add=add, th=th, width=W,
                               c2=C2, pack_out=pack_out,
                               compute_dtype=compute_dtype)

    if pack_out:
        out_shape = jax.ShapeDtypeStruct((N, H, W * C2), x_nhwc.dtype)
        out_spec = pl.BlockSpec((1, th, W * C2), lambda n, t: (n, t, 0))
    else:
        out_shape = jax.ShapeDtypeStruct((N, H, W, C2), x_nhwc.dtype)
        out_spec = pl.BlockSpec((1, th, W, C2), lambda n, t: (n, t, 0, 0))

    y = pl.pallas_call(
        kernel,
        out_shape=out_shape,
        grid_spec=pltpu.PrefetchScalarGridSpec(
            num_scalar_prefetch=0,
            grid=(N, T),
            in_specs=[
                # halo row above / the row tile / halo row below.  The halo
                # index is clamped at the image edge; the kernel zeroes the
                # cv1 output of halo rows that are really conv padding.
                pl.BlockSpec((1, 1, W, C1),
                             lambda n, t: (n, jnp.maximum(t * th - 1, 0), 0, 0)),
                pl.BlockSpec((1, th, W, C1), lambda n, t: (n, t, 0, 0)),
                pl.BlockSpec((1, 1, W, C1),
                             lambda n, t: (n, jnp.minimum((t + 1) * th, H - 1),
                                           0, 0)),
                # Weights/biases: constant index_map -> DMA'd once.  (A
                # pipeline_mode=pl.Buffered(1) would also drop their second,
                # unused VMEM pipeline buffer for very large channel counts.)
                pl.BlockSpec((C1, Cm), lambda n, t: (0, 0)),
                pl.BlockSpec((1, Cm), lambda n, t: (0, 0)),
                pl.BlockSpec((3 * Cm, 3 * C2), lambda n, t: (0, 0)),
                pl.BlockSpec((1, C2), lambda n, t: (0, 0)),
            ],
            out_specs=out_spec,
        ),
        compiler_params=pltpu.CompilerParams(
            dimension_semantics=("parallel", "parallel"),
            vmem_limit_bytes=48 * 1024 * 1024),
    )(x_nhwc, x_nhwc, x_nhwc, w1c, b1f, vc, b2f)

    if pack_out:
        y = y.reshape(N, H, W, C2)
    return y


# ----------------------------------------------------------------------------
# Parameter construction (deterministic, synthetic) + BN folding
# ----------------------------------------------------------------------------
def _bn_params(c, shift):
    gamma = 1.0 + 0.1 * jnp.arange(c, dtype=jnp.float32) / c
    beta = 0.05 * jnp.arange(c, dtype=jnp.float32) - shift
    mean = 0.01 * jnp.arange(c, dtype=jnp.float32)
    var = 1.0 + 0.2 * jnp.arange(c, dtype=jnp.float32) / c
    return gamma, beta, mean, var


def make_bottleneck_params(key, c1, c2, e=0.5):
    c_ = int(c2 * e)
    k1, k2 = jax.random.split(key)
    # PyTorch conv weight shapes: (c_out, c_in, kh, kw), bias=False
    w_cv1 = 0.1 * jax.random.normal(k1, (c_, c1, 1, 1), jnp.float32)
    w_cv2 = 0.1 * jax.random.normal(k2, (c2, c_, 3, 3), jnp.float32)
    bn1 = _bn_params(c_, 0.02)
    bn2 = _bn_params(c2, 0.03)
    return w_cv1, bn1, w_cv2, bn2


def fold_params(w_cv1, bn1, w_cv2, bn2):
    g1, be1, m1, v1 = bn1
    g2, be2, m2, v2 = bn2
    s1 = g1 / jnp.sqrt(v1 + BN_EPS)                  # (Cm,)
    s2 = g2 / jnp.sqrt(v2 + BN_EPS)                  # (C2,)
    c2, cm = w_cv2.shape[0], w_cv2.shape[1]
    # cv1: (Cm, C1, 1, 1) -> matmul weight (C1, Cm), scaled per out-channel
    w1 = jnp.transpose(w_cv1[:, :, 0, 0], (1, 0)) * s1[None, :]
    b1 = (be1 - m1 * s1)[None, :]                    # (1, Cm)
    # cv2: (C2, Cm, 3, 3) -> [dy, dx, Cm, C2], scaled per out-channel, then
    # packed so matmul rows = (dy, c_in) and matmul cols = (dx, c_out).
    w2 = jnp.transpose(w_cv2 * s2[:, None, None, None], (2, 3, 1, 0))
    v = jnp.transpose(w2, (0, 2, 1, 3)).reshape(3 * cm, 3 * c2)
    b2 = (be2 - m2 * s2)[None, :]                    # (1, C2)
    return w1, b1, v, b2


# ----------------------------------------------------------------------------
# Public wrapper: NCHW in / NCHW out (like the PyTorch module)
# ----------------------------------------------------------------------------
def bottleneck_forward(x_nchw, params, *, shortcut=True, tile_h=None,
                       compute_dtype=jnp.bfloat16):
    w_cv1, bn1, w_cv2, bn2 = params
    c1 = x_nchw.shape[1]
    c2 = w_cv2.shape[0]
    add = shortcut and (c1 == c2)
    w1, b1, v, b2 = fold_params(w_cv1, bn1, w_cv2, bn2)
    # NOTE: a full NHWC network would avoid these boundary transposes.
    x_nhwc = jnp.transpose(x_nchw, (0, 2, 3, 1))
    y_nhwc = bottleneck_pallas_nhwc(x_nhwc, w1, b1, v, b2, add=add,
                                    tile_h=tile_h, compute_dtype=compute_dtype)
    return jnp.transpose(y_nhwc, (0, 3, 1, 2))


# ----------------------------------------------------------------------------
# Pure-JAX reference (lax conv) for validation
# ----------------------------------------------------------------------------
def bottleneck_reference(x_nchw, params, *, shortcut=True):
    w_cv1, bn1, w_cv2, bn2 = params

    def conv_bn_silu(x_nhwc, w_torch, bn, pad):
        w = jnp.transpose(w_torch, (2, 3, 1, 0))     # OIHW -> HWIO
        y = lax.conv_general_dilated(
            x_nhwc, w, window_strides=(1, 1),
            padding=[(pad, pad), (pad, pad)],
            dimension_numbers=('NHWC', 'HWIO', 'NHWC'))
        gamma, beta, mean, var = bn
        y = (y - mean) / jnp.sqrt(var + BN_EPS) * gamma + beta
        return y * jax.nn.sigmoid(y)

    c1 = x_nchw.shape[1]
    c2 = w_cv2.shape[0]
    add = shortcut and (c1 == c2)
    x_nhwc = jnp.transpose(x_nchw, (0, 2, 3, 1))
    h = conv_bn_silu(x_nhwc, w_cv1, bn1, 0)
    h = conv_bn_silu(h, w_cv2, bn2, 1)
    y = x_nhwc + h if add else h
    return jnp.transpose(y, (0, 3, 1, 2))


if __name__ == "__main__":
    key = jax.random.PRNGKey(0)
    kx, kp = jax.random.split(key)

    N, C1, H, W = 2, 8, 16, 16      # c1 == c2 -> shortcut add is active
    C2, E = 8, 0.5

    x = jax.random.normal(kx, (N, C1, H, W), jnp.float32)   # NCHW, like torch
    params = make_bottleneck_params(kp, C1, C2, E)

    y_ref = jax.block_until_ready(bottleneck_reference(x, params, shortcut=True))

    # f32-compute path with explicit row tiling (2 tiles -> exercises halo
    # fetch and edge masking); exact math, tight tolerance.
    y32 = bottleneck_forward(x, params, shortcut=True, tile_h=8,
                             compute_dtype=jnp.float32)
    y32 = jax.block_until_ready(y32)
    assert y32.shape == (N, C2, H, W)
    err32 = float(jnp.max(jnp.abs(y32 - y_ref)))
    assert err32 < 1e-4, f"f32 path mismatch vs reference: {err32}"

    # Default bf16 MXU path (auto tile size) -- bf16-appropriate tolerance.
    ybf = bottleneck_forward(x, params, shortcut=True)
    ybf = jax.block_until_ready(ybf)
    assert ybf.shape == (N, C2, H, W)
    errbf = float(jnp.max(jnp.abs(ybf - y_ref)))
    assert errbf < 5e-2, f"bf16 path mismatch vs reference: {errbf}"

    print("KERNEL_OK")
</pallas_src>

<mosaic_0001>
module attributes {stable_mosaic.version = 11 : i64} {
  func.func @_bottleneck_kernel(%arg0: i32, %arg1: i32, %arg2: memref<1x1x16x8xf32, #tpu.memory_space<vmem>>, %arg3: memref<1x8x16x8xf32, #tpu.memory_space<vmem>>, %arg4: memref<1x1x16x8xf32, #tpu.memory_space<vmem>>, %arg5: memref<8x4xf32, #tpu.memory_space<vmem>>, %arg6: memref<1x4xf32, #tpu.memory_space<vmem>>, %arg7: memref<12x24xf32, #tpu.memory_space<vmem>>, %arg8: memref<1x8xf32, #tpu.memory_space<vmem>>, %arg9: memref<1x8x128xf32, #tpu.memory_space<vmem>>) attributes {dimension_semantics = [#tpu.dimension_semantics<parallel>, #tpu.dimension_semantics<parallel>], iteration_bounds = array<i64: 2, 2>, scalar_prefetch = 0 : i64, scratch_operands = 0 : i64, tpu.core_type = #tpu.core_type<tc>, window_params = [{transform_indices = @transform_0, window_bounds = array<i64: 1, 1, 16, 8>}, {transform_indices = @transform_1, window_bounds = array<i64: 1, 8, 16, 8>}, {transform_indices = @transform_2, window_bounds = array<i64: 1, 1, 16, 8>}, {pipeline_mode = #tpu.pipeline_mode<synchronous>, transform_indices = @transform_3, window_bounds = array<i64: 8, 4>}, {pipeline_mode = #tpu.pipeline_mode<synchronous>, transform_indices = @transform_4, window_bounds = array<i64: 1, 4>}, {pipeline_mode = #tpu.pipeline_mode<synchronous>, transform_indices = @transform_5, window_bounds = array<i64: 12, 24>}, {pipeline_mode = #tpu.pipeline_mode<synchronous>, transform_indices = @transform_6, window_bounds = array<i64: 1, 8>}, {transform_indices = @transform_7, window_bounds = array<i64: 1, 8, 128>}]} {
    %c0 = arith.constant 0 : index
    %c0_0 = arith.constant 0 : index
    %c0_1 = arith.constant 0 : index
    %c0_2 = arith.constant 0 : index
    %0 = vector.load %arg2[%c0, %c0_0, %c0_1, %c0_2] : memref<1x1x16x8xf32, #tpu.memory_space<vmem>>, vector<1x1x16x8xf32>
    %1 = vector.shape_cast %0 : vector<1x1x16x8xf32> to vector<1x16x8xf32>
    %c0_3 = arith.constant 0 : index
    %c0_4 = arith.constant 0 : index
    %c0_5 = arith.constant 0 : index
    %c0_6 = arith.constant 0 : index
    %2 = vector.load %arg3[%c0_3, %c0_4, %c0_5, %c0_6] : memref<1x8x16x8xf32, #tpu.memory_space<vmem>>, vector<1x8x16x8xf32>
    %3 = vector.shape_cast %2 : vector<1x8x16x8xf32> to vector<8x16x8xf32>
    %c0_7 = arith.constant 0 : index
    %c0_8 = arith.constant 0 : index
    %c0_9 = arith.constant 0 : index
    %c0_10 = arith.constant 0 : index
    %4 = vector.load %arg4[%c0_7, %c0_8, %c0_9, %c0_10] : memref<1x1x16x8xf32, #tpu.memory_space<vmem>>, vector<1x1x16x8xf32>
    %5 = vector.shape_cast %4 : vector<1x1x16x8xf32> to vector<1x16x8xf32>
    %6 = tpu.concatenate %1, %3, %5 in 0 : vector<1x16x8xf32>, vector<8x16x8xf32>, vector<1x16x8xf32> -> vector<10x16x8xf32>
    %7 = vector.shape_cast %6 : vector<10x16x8xf32> to vector<160x8xf32>
    %c0_11 = arith.constant 0 : index
    %c0_12 = arith.constant 0 : index
    %8 = vector.load %arg5[%c0_11, %c0_12] : memref<8x4xf32, #tpu.memory_space<vmem>>, vector<8x4xf32>
    %cst = arith.constant dense<0.000000e+00> : vector<160x4xf32>
    %9 = tpu.matmul %7, %8, %cst {dimension_numbers = #tpu.dot_dimension_numbers<[1], [0], [0], [1], [0, 0, 1, 1], [], []>} : vector<160x8xf32>, vector<8x4xf32>, vector<160x4xf32> -> vector<160x4xf32>
    %c0_13 = arith.constant 0 : index
    %c0_14 = arith.constant 0 : index
    %10 = vector.load %arg6[%c0_13, %c0_14] : memref<1x4xf32, #tpu.memory_space<vmem>>, vector<1x4xf32>
    %11 = vector.broadcast %10 : vector<1x4xf32> to vector<160x4xf32>
    %12 = arith.addf %9, %11 : vector<160x4xf32>
    %13 = arith.negf %12 : vector<160x4xf32>
    %14 = math.exp %13 : vector<160x4xf32>
    %cst_15 = arith.constant 1.000000e+00 : f32
    %15 = vector.broadcast %cst_15 : f32 to vector<160x4xf32>
    %16 = arith.addf %15, %14 : vector<160x4xf32>
    %17 = arith.divf %15, %16 : vector<160x4xf32>
    %18 = arith.mulf %12, %17 : vector<160x4xf32>
    %19 = tpu.iota {dimensions = array<i32: 0>} : vector<160x1xi32>
    %c0_i32 = arith.constant 0 : i32
    %20 = arith.cmpi eq, %arg1, %c0_i32 : i32
    %c16_i32 = arith.constant 16 : i32
    %21 = vector.broadcast %c16_i32 : i32 to vector<160x1xi32>
    %22 = arith.cmpi slt, %19, %21 : vector<160x1xi32>
    %23 = vector.broadcast %20 : i1 to vector<160x1xi1>
    %24 = arith.andi %23, %22 : vector<160x1xi1>
    %c1_i32 = arith.constant 1 : i32
    %25 = arith.cmpi eq, %arg1, %c1_i32 : i32
    %c144_i32 = arith.constant 144 : i32
    %26 = vector.broadcast %c144_i32 : i32 to vector<160x1xi32>
    %27 = arith.cmpi sge, %19, %26 : vector<160x1xi32>
    %28 = vector.broadcast %25 : i1 to vector<160x1xi1>
    %29 = arith.andi %28, %27 : vector<160x1xi1>
    %30 = arith.ori %24, %29 : vector<160x1xi1>
    %cst_16 = arith.constant 0.000000e+00 : f32
    %31 = vector.shape_cast %30 : vector<160x1xi1> to vector<160x1xi1>
    %32 = vector.broadcast %31 : vector<160x1xi1> to vector<160x4xi1>
    %33 = vector.broadcast %cst_16 : f32 to vector<160x4xf32>
    %34 = arith.select %32, %33, %18 : vector<160x4xi1>, vector<160x4xf32>
    %35 = vector.extract_strided_slice %34 {offsets = [0, 0], sizes = [128, 4], strides = [1, 1]} : vector<160x4xf32> to vector<128x4xf32>
    %36 = vector.extract_strided_slice %34 {offsets = [16, 0], sizes = [128, 4], strides = [1, 1]} : vector<160x4xf32> to vector<128x4xf32>
    %37 = vector.extract_strided_slice %34 {offsets = [32, 0], sizes = [128, 4], strides = [1, 1]} : vector<160x4xf32> to vector<128x4xf32>
    %38 = tpu.concatenate %35, %36, %37 in 1 : vector<128x4xf32>, vector<128x4xf32>, vector<128x4xf32> -> vector<128x12xf32>
    %c0_17 = arith.constant 0 : index
    %c0_18 = arith.constant 0 : index
    %39 = vector.load %arg7[%c0_17, %c0_18] : memref<12x24xf32, #tpu.memory_space<vmem>>, vector<12x24xf32>
    %cst_19 = arith.constant dense<0.000000e+00> : vector<128x24xf32>
    %40 = tpu.matmul %38, %39, %cst_19 {dimension_numbers = #tpu.dot_dimension_numbers<[1], [0], [0], [1], [0, 0, 1, 1], [], []>} : vector<128x12xf32>, vector<12x24xf32>, vector<128x24xf32> -> vector<128x24xf32>
    %41 = vector.extract_strided_slice %40 {offsets = [0, 0], sizes = [128, 8], strides = [1, 1]} : vector<128x24xf32> to vector<128x8xf32>
    %42 = vector.shape_cast %41 : vector<128x8xf32> to vector<8x16x8xf32>
    %43 = vector.extract_strided_slice %40 {offsets = [0, 8], sizes = [128, 8], strides = [1, 1]} : vector<128x24xf32> to vector<128x8xf32>
    %44 = vector.shape_cast %43 : vector<128x8xf32> to vector<8x16x8xf32>
    %45 = vector.extract_strided_slice %40 {offsets = [0, 16], sizes = [128, 8], strides = [1, 1]} : vector<128x24xf32> to vector<128x8xf32>
    %46 = vector.shape_cast %45 : vector<128x8xf32> to vector<8x16x8xf32>
    %cst_20 = arith.constant 0.000000e+00 : f32
    %47 = vector.broadcast %cst_20 : f32 to vector<8x1x8xf32>
    %48 = vector.extract_strided_slice %42 {offsets = [0, 0, 0], sizes = [8, 15, 8], strides = [1, 1, 1]} : vector<8x16x8xf32> to vector<8x15x8xf32>
    %49 = tpu.concatenate %47, %48 in 1 : vector<8x1x8xf32>, vector<8x15x8xf32> -> vector<8x16x8xf32>
    %50 = vector.extract_strided_slice %46 {offsets = [0, 1, 0], sizes = [8, 15, 8], strides = [1, 1, 1]} : vector<8x16x8xf32> to vector<8x15x8xf32>
    %51 = tpu.concatenate %50, %47 in 1 : vector<8x15x8xf32>, vector<8x1x8xf32> -> vector<8x16x8xf32>
    %52 = arith.addf %44, %49 : vector<8x16x8xf32>
    %53 = arith.addf %52, %51 : vector<8x16x8xf32>
    %c0_21 = arith.constant 0 : index
    %c0_22 = arith.constant 0 : index
    %54 = vector.load %arg8[%c0_21, %c0_22] : memref<1x8xf32, #tpu.memory_space<vmem>>, vector<1x8xf32>
    %55 = vector.shape_cast %54 : vector<1x8xf32> to vector<1x1x8xf32>
    %56 = vector.broadcast %55 : vector<1x1x8xf32> to vector<8x16x8xf32>
    %57 = arith.addf %53, %56 : vector<8x16x8xf32>
    %58 = arith.negf %57 : vector<8x16x8xf32>
    %59 = math.exp %58 : vector<8x16x8xf32>
    %cst_23 = arith.constant 1.000000e+00 : f32
    %60 = vector.broadcast %cst_23 : f32 to vector<8x16x8xf32>
    %61 = arith.addf %60, %59 : vector<8x16x8xf32>
    %62 = arith.divf %60, %61 : vector<8x16x8xf32>
    %63 = arith.mulf %57, %62 : vector<8x16x8xf32>
    %c0_24 = arith.constant 0 : index
    %c0_25 = arith.constant 0 : index
    %c0_26 = arith.constant 0 : index
    %c0_27 = arith.constant 0 : index
    %64 = vector.load %arg3[%c0_24, %c0_25, %c0_26, %c0_27] : memref<1x8x16x8xf32, #tpu.memory_space<vmem>>, vector<1x8x16x8xf32>
    %65 = vector.shape_cast %64 : vector<1x8x16x8xf32> to vector<8x16x8xf32>
    %66 = arith.addf %63, %65 : vector<8x16x8xf32>
    %67 = vector.extract_strided_slice %66 {offsets = [0, 0, 0], sizes = [8, 1, 8], strides = [1, 1, 1]} : vector<8x16x8xf32> to vector<8x1x8xf32>
    %68 = vector.shape_cast %67 : vector<8x1x8xf32> to vector<8x8xf32>
    %69 = vector.extract_strided_slice %66 {offsets = [0, 1, 0], sizes = [8, 1, 8], strides = [1, 1, 1]} : vector<8x16x8xf32> to vector<8x1x8xf32>
    %70 = vector.shape_cast %69 : vector<8x1x8xf32> to vector<8x8xf32>
    %71 = vector.extract_strided_slice %66 {offsets = [0, 2, 0], sizes = [8, 1, 8], strides = [1, 1, 1]} : vector<8x16x8xf32> to vector<8x1x8xf32>
    %72 = vector.shape_cast %71 : vector<8x1x8xf32> to vector<8x8xf32>
    %73 = vector.extract_strided_slice %66 {offsets = [0, 3, 0], sizes = [8, 1, 8], strides = [1, 1, 1]} : vector<8x16x8xf32> to vector<8x1x8xf32>
    %74 = vector.shape_cast %73 : vector<8x1x8xf32> to vector<8x8xf32>
    %75 = vector.extract_strided_slice %66 {offsets = [0, 4, 0], sizes = [8, 1, 8], strides = [1, 1, 1]} : vector<8x16x8xf32> to vector<8x1x8xf32>
    %76 = vector.shape_cast %75 : vector<8x1x8xf32> to vector<8x8xf32>
    %77 = vector.extract_strided_slice %66 {offsets = [0, 5, 0], sizes = [8, 1, 8], strides = [1, 1, 1]} : vector<8x16x8xf32> to vector<8x1x8xf32>
    %78 = vector.shape_cast %77 : vector<8x1x8xf32> to vector<8x8xf32>
    %79 = vector.extract_strided_slice %66 {offsets = [0, 6, 0], sizes = [8, 1, 8], strides = [1, 1, 1]} : vector<8x16x8xf32> to vector<8x1x8xf32>
    %80 = vector.shape_cast %79 : vector<8x1x8xf32> to vector<8x8xf32>
    %81 = vector.extract_strided_slice %66 {offsets = [0, 7, 0], sizes = [8, 1, 8], strides = [1, 1, 1]} : vector<8x16x8xf32> to vector<8x1x8xf32>
    %82 = vector.shape_cast %81 : vector<8x1x8xf32> to vector<8x8xf32>
    %83 = vector.extract_strided_slice %66 {offsets = [0, 8, 0], sizes = [8, 1, 8], strides = [1, 1, 1]} : vector<8x16x8xf32> to vector<8x1x8xf32>
    %84 = vector.shape_cast %83 : vector<8x1x8xf32> to vector<8x8xf32>
    %85 = vector.extract_strided_slice %66 {offsets = [0, 9, 0], sizes = [8, 1, 8], strides = [1, 1, 1]} : vector<8x16x8xf32> to vector<8x1x8xf32>
    %86 = vector.shape_cast %85 : vector<8x1x8xf32> to vector<8x8xf32>
    %87 = vector.extract_strided_slice %66 {offsets = [0, 10, 0], sizes = [8, 1, 8], strides = [1, 1, 1]} : vector<8x16x8xf32> to vector<8x1x8xf32>
    %88 = vector.shape_cast %87 : vector<8x1x8xf32> to vector<8x8xf32>
    %89 = vector.extract_strided_slice %66 {offsets = [0, 11, 0], sizes = [8, 1, 8], strides = [1, 1, 1]} : vector<8x16x8xf32> to vector<8x1x8xf32>
    %90 = vector.shape_cast %89 : vector<8x1x8xf32> to vector<8x8xf32>
    %91 = vector.extract_strided_slice %66 {offsets = [0, 12, 0], sizes = [8, 1, 8], strides = [1, 1, 1]} : vector<8x16x8xf32> to vector<8x1x8xf32>
    %92 = vector.shape_cast %91 : vector<8x1x8xf32> to vector<8x8xf32>
    %93 = vector.extract_strided_slice %66 {offsets = [0, 13, 0], sizes = [8, 1, 8], strides = [1, 1, 1]} : vector<8x16x8xf32> to vector<8x1x8xf32>
    %94 = vector.shape_cast %93 : vector<8x1x8xf32> to vector<8x8xf32>
    %95 = vector.extract_strided_slice %66 {offsets = [0, 14, 0], sizes = [8, 1, 8], strides = [1, 1, 1]} : vector<8x16x8xf32> to vector<8x1x8xf32>
    %96 = vector.shape_cast %95 : vector<8x1x8xf32> to vector<8x8xf32>
    %97 = vector.extract_strided_slice %66 {offsets = [0, 15, 0], sizes = [8, 1, 8], strides = [1, 1, 1]} : vector<8x16x8xf32> to vector<8x1x8xf32>
    %98 = vector.shape_cast %97 : vector<8x1x8xf32> to vector<8x8xf32>
    %99 = tpu.concatenate %68, %70, %72, %74, %76, %78, %80, %82, %84, %86, %88, %90, %92, %94, %96, %98 in 1 : vector<8x8xf32>, vector<8x8xf32>, vector<8x8xf32>, vector<8x8xf32>, vector<8x8xf32>, vector<8x8xf32>, vector<8x8xf32>, vector<8x8xf32>, vector<8x8xf32>, vector<8x8xf32>, vector<8x8xf32>, vector<8x8xf32>, vector<8x8xf32>, vector<8x8xf32>, vector<8x8xf32>, vector<8x8xf32> -> vector<8x128xf32>
    %c0_28 = arith.constant 0 : index
    %c0_29 = arith.constant 0 : index
    %c0_30 = arith.constant 0 : index
    %100 = vector.load %arg9[%c0_28, %c0_29, %c0_30] : memref<1x8x128xf32, #tpu.memory_space<vmem>>, vector<1x8x128xf32>
    %101 = vector.shape_cast %100 : vector<1x8x128xf32> to vector<8x128xf32>
    %102 = vector.shape_cast %99 : vector<8x128xf32> to vector<1x8x128xf32>
    tpu.vector_store %arg9[%c0_28, %c0_29, %c0_30], %102 {strides = array<i32>} : memref<1x8x128xf32, #tpu.memory_space<vmem>>, vector<1x8x128xf32>,
    return
  }
  func.func @transform_0(%arg0: i32, %arg1: i32) -> (i32, i32, i32, i32) {
    %c8_i32 = arith.constant 8 : i32
    %0 = arith.muli %arg1, %c8_i32 : i32
    %c1_i32 = arith.constant 1 : i32
    %1 = arith.subi %0, %c1_i32 : i32
    %c0_i32 = arith.constant 0 : i32
    %2 = arith.maxsi %1, %c0_i32 : i32
    %c0_i32_0 = arith.constant 0 : i32
    %c0_i32_1 = arith.constant 0 : i32
    %c0_i32_2 = arith.constant 0 : i32
    return %arg0, %2, %c0_i32_0, %c0_i32_1 : i32, i32, i32, i32
  }
  func.func @transform_1(%arg0: i32, %arg1: i32) -> (i32, i32, i32, i32) {
    %c0_i32 = arith.constant 0 : i32
    %c0_i32_0 = arith.constant 0 : i32
    %c0_i32_1 = arith.constant 0 : i32
    return %arg0, %arg1, %c0_i32, %c0_i32_0 : i32, i32, i32, i32
  }
  func.func @transform_2(%arg0: i32, %arg1: i32) -> (i32, i32, i32, i32) {
    %c1_i32 = arith.constant 1 : i32
    %0 = arith.addi %arg1, %c1_i32 : i32
    %c8_i32 = arith.constant 8 : i32
    %1 = arith.muli %0, %c8_i32 : i32
    %c15_i32 = arith.constant 15 : i32
    %2 = arith.minsi %1, %c15_i32 : i32
    %c0_i32 = arith.constant 0 : i32
    %c0_i32_0 = arith.constant 0 : i32
    %c0_i32_1 = arith.constant 0 : i32
    return %arg0, %2, %c0_i32, %c0_i32_0 : i32, i32, i32, i32
  }
  func.func @transform_3(%arg0: i32, %arg1: i32) -> (i32, i32) {
    %c0_i32 = arith.constant 0 : i32
    %c0_i32_0 = arith.constant 0 : i32
    %c0_i32_1 = arith.constant 0 : i32
    return %c0_i32, %c0_i32_0 : i32, i32
  }
  func.func @transform_4(%arg0: i32, %arg1: i32) -> (i32, i32) {
    %c0_i32 = arith.constant 0 : i32
    %c0_i32_0 = arith.constant 0 : i32
    %c0_i32_1 = arith.constant 0 : i32
    return %c0_i32, %c0_i32_0 : i32, i32
  }
  func.func @transform_5(%arg0: i32, %arg1: i32) -> (i32, i32) {
    %c0_i32 = arith.constant 0 : i32
    %c0_i32_0 = arith.constant 0 : i32
    %c0_i32_1 = arith.constant 0 : i32
    return %c0_i32, %c0_i32_0 : i32, i32
  }
  func.func @transform_6(%arg0: i32, %arg1: i32) -> (i32, i32) {
    %c0_i32 = arith.constant 0 : i32
    %c0_i32_0 = arith.constant 0 : i32
    %c0_i32_1 = arith.constant 0 : i32
    return %c0_i32, %c0_i32_0 : i32, i32
  }
  func.func @transform_7(%arg0: i32, %arg1: i32) -> (i32, i32, i32) {
    %c0_i32 = arith.constant 0 : i32
    %c0_i32_0 = arith.constant 0 : i32
    return %arg0, %arg1, %c0_i32 : i32, i32, i32
  }
}

</mosaic_0001>

<llo_original>
// kernel: tpu_custom_call.1
$region0: #{tpu_custom_call.1}
  #allocation0 [shape = 'u32[]', space=smem, size = 0x4, offset = 0x4, fixed_abs, tag = 'smem constant byte address 0x4 - core index']
  #allocation1 [shape = 'u32[144,128]{1,0:T(1,128)}', space=vmem, size = 0x12000, scoped, tag = 'internal scratch']
  %s0 = inlined_call_operand.vmem [shape: f32[2,16,16,8], index: 0, kind: input, shape index: {}]
  %s1 = inlined_call_operand.vmem [shape: f32[2,16,16,8], index: 1, kind: input, shape index: {}]
  %s2 = inlined_call_operand.vmem [shape: f32[2,16,16,8], index: 2, kind: input, shape index: {}]
  %s3 = inlined_call_operand.vmem [shape: f32[8,4], index: 3, kind: input, shape index: {}]
  %s4 = inlined_call_operand.vmem [shape: f32[1,4], index: 4, kind: input, shape index: {}]
  %s5 = inlined_call_operand.vmem [shape: f32[12,24], index: 5, kind: input, shape index: {}]
  %s6 = inlined_call_operand.vmem [shape: f32[1,8], index: 6, kind: input, shape index: {}]
  %s7 = inlined_call_operand.hbm [shape: f32[2,16,128], index: 7, kind: output, shape index: {}]
  %s8 = sld [smem:[#allocation0]]
  $region61: #{tpu_custom_call.1} parent=0
    _
  %s10 = ssub.s32 1, %s8
  %s11 = scalar_select 0, %s10, %s8
  $region1: #{tpu_custom_call.1} parent=0
    #allocation2 [shape = 'u8[8192]{0}', space=vmem, size = 0x2000, scoped, tag = 'output window, operand 0']
    #allocation3 [shape = 's32[2]{0}', space=sflag, size = 0x8, scoped, tag = 'scoped memory for tpu_custom_call.1']
    %12 = vsyncpa [#allocation3], 0
    %s13 = scalar_lea.sflag [#allocation3], 1
    %14 = vsyncpa %s13, 0
    loop: start=0, step=1, limit=6
    $region2: #{tpu_custom_call.1} parent=1 // loop_pre_header
      _
    $region3: #{tpu_custom_call.1} parent=1 // loop_header
      %s16 = sphi 0, %s20
      %p17 = scmp.ge.s32.totalorder %s16, 6
      %s23 = sphi 0, %s35
      %s24 = sphi 0, %s31
      %s25 = sphi 0, %s23
      %s26 = sphi 0, %s24
      %s27 = sphi 0, %s25
      %s28 = sphi 0, %s26
      %s48 = sphi 0, %s50
      %s51 = sphi 0, %s48
      %s52 = sphi 0, %s51
      %s68 = sphi 0, %s52
      %s76 = sphi 0, %s78
      %s79 = sphi 0, %s76
      %s80 = sphi 0, %s79
      %s96 = sphi 0, %s80
      %s112 = sphi 0, %s114
      %s115 = sphi 0, %s112
      %s116 = sphi 0, %s115
      %s132 = sphi 0, %s116
      %s136 = sphi 0, %s136
      %s138 = sphi 0, %s136
      %s139 = sphi 0, %s138
      %s153 = sphi 0, %s139
      %s157 = sphi 0, %s157
      %s159 = sphi 0, %s157
      %s160 = sphi 0, %s159
      %s174 = sphi 0, %s160
      %s178 = sphi 0, %s178
      %s180 = sphi 0, %s178
      %s181 = sphi 0, %s180
      %s195 = sphi 0, %s181
      %s199 = sphi 0, %s199
      %s201 = sphi 0, %s199
      %s202 = sphi 0, %s201
      %s216 = sphi 0, %s202
      %s224 = sphi 0, %s226
      %s227 = sphi 0, %s224
      %s228 = sphi 0, %s227
      %s244 = sphi 0, %s228
    $region4: #{tpu_custom_call.1} parent=1 // loop_header_branch
      %19 = sbr.rel (%p17) target = $region8
    $region5: #{tpu_custom_call.1} parent=1 // loop_body
      %s21 = ssub.s32 %s16, 1
      %s22 = ssub.s32 %s16, 2
      %s29 = sadd.s32 1, %s24
      %p30 = scmp.ge.s32.totalorder %s29, 2
      %s31 = scalar_select %p30, 0, %s29
      %s32 = sadd.s32 1, %s23
      %s33 = scalar_select %p30, %s32, %s23
      %p34 = scmp.ge.s32.totalorder %s33, 2
      %s35 = scalar_select %p34, 0, %s33
      %s36 = smul.u32 %s24, 8
      %s37 = ssub.s32 %s36, 1
      %p38 = scmp.gt.s32.totalorder %s37, 0
      %s39 = scalar_select %p38, %s37, 0
      %s40 = smul.u32 %s31, 8
      %s41 = ssub.s32 %s40, 1
      %p42 = scmp.gt.s32.totalorder %s41, 0
      %s43 = scalar_select %p42, %s41, 0
      %s44 = ssub.s32 %s23, %s35
      %s45 = ssub.s32 %s39, %s43
      %s46 = sor.u32 %s44, %s45
      %p47 = scmp.eq.s32.totalorder %s46, 0
      %s49 = sadd.s32 %s48, 1
      %s50 = scalar_select %p47, %s48, %s49
      %p53 = pneg %p47
      %p54 = scmp.eq.s32.totalorder %s16, 3
      %p55 = por %p53, %p54
      %p56 = scmp.ne.s32.totalorder %s48, %s51
      %p57 = scmp.eq.s32.totalorder %s16, 0
      %p58 = por %p56, %p57
      %p59 = scmp.ne.s32.totalorder %s48, %s51
      %p60 = scmp.eq.s32.totalorder %s21, 3
      %p61 = por %p59, %p60
      %p62 = scmp.ne.s32.totalorder %s51, %s52
      %p63 = scmp.eq.s32.totalorder %s21, 0
      %p64 = por %p62, %p63
      %p65 = scmp.ne.s32.totalorder %s51, %s52
      %p66 = scmp.eq.s32.totalorder %s22, 3
      %p67 = por %p65, %p66
      %p69 = scmp.ne.s32.totalorder %s52, %s68
      %p70 = scmp.eq.s32.totalorder %s22, 0
      %p71 = por %p69, %p70
      %s72 = ssub.s32 %s23, %s35
      %s73 = ssub.s32 %s24, %s31
      %s74 = sor.u32 %s72, %s73
      %p75 = scmp.eq.s32.totalorder %s74, 0
      %s77 = sadd.s32 %s76, 1
      %s78 = scalar_select %p75, %s76, %s77
      %p81 = pneg %p75
      %p82 = scmp.eq.s32.totalorder %s16, 3
      %p83 = por %p81, %p82
      %p84 = scmp.ne.s32.totalorder %s76, %s79
      %p85 = scmp.eq.s32.totalorder %s16, 0
      %p86 = por %p84, %p85
      %p87 = scmp.ne.s32.totalorder %s76, %s79
      %p88 = scmp.eq.s32.totalorder %s21, 3
      %p89 = por %p87, %p88
      %p90 = scmp.ne.s32.totalorder %s79, %s80
      %p91 = scmp.eq.s32.totalorder %s21, 0
      %p92 = por %p90, %p91
      %p93 = scmp.ne.s32.totalorder %s79, %s80
      %p94 = scmp.eq.s32.totalorder %s22, 3
      %p95 = por %p93, %p94
      %p97 = scmp.ne.s32.totalorder %s80, %s96
      %p98 = scmp.eq.s32.totalorder %s22, 0
      %p99 = por %p97, %p98
      %s100 = sadd.s32 %s24, 1
      %s101 = smul.u32 %s100, 8
      %p102 = scmp.lt.s32.totalorder %s101, 15
      %s103 = scalar_select %p102, %s101, 15
      %s104 = sadd.s32 %s31, 1
      %s105 = smul.u32 %s104, 8
      %p106 = scmp.lt.s32.totalorder %s105, 15
      %s107 = scalar_select %p106, %s105, 15
      %s108 = ssub.s32 %s23, %s35
      %s109 = ssub.s32 %s103, %s107
      %s110 = sor.u32 %s108, %s109
      %p111 = scmp.eq.s32.totalorder %s110, 0
      %s113 = sadd.s32 %s112, 1
      %s114 = scalar_select %p111, %s112, %s113
      %p117 = pneg %p111
      %p118 = scmp.eq.s32.totalorder %s16, 3
      %p119 = por %p117, %p118
      %p120 = scmp.ne.s32.totalorder %s112, %s115
      %p121 = scmp.eq.s32.totalorder %s16, 0
      %p122 = por %p120, %p121
      %p123 = scmp.ne.s32.totalorder %s112, %s115
      %p124 = scmp.eq.s32.totalorder %s21, 3
      %p125 = por %p123, %p124
      %p126 = scmp.ne.s32.totalorder %s115, %s116
      %p127 = scmp.eq.s32.totalorder %s21, 0
      %p128 = por %p126, %p127
      %p129 = scmp.ne.s32.totalorder %s115, %s116
      %p130 = scmp.eq.s32.totalorder %s22, 3
      %p131 = por %p129, %p130
      %p133 = scmp.ne.s32.totalorder %s116, %s132
      %p134 = scmp.eq.s32.totalorder %s22, 0
      %p135 = por %p133, %p134
      %s137 = sadd.s32 %s136, 1
      %p140 = scmp.eq.s32.totalorder %s16, 3
      %p141 = scmp.ne.s32.totalorder %s136, %s138
      %p142 = scmp.eq.s32.totalorder %s16, 0
      %p143 = por %p141, %p142
      %p144 = scmp.ne.s32.totalorder %s136, %s138
      %p145 = scmp.eq.s32.totalorder %s21, 3
      %p146 = por %p144, %p145
      %p147 = scmp.ne.s32.totalorder %s138, %s139
      %p148 = scmp.eq.s32.totalorder %s21, 0
      %p149 = por %p147, %p148
      %p150 = scmp.ne.s32.totalorder %s138, %s139
      %p151 = scmp.eq.s32.totalorder %s22, 3
      %p152 = por %p150, %p151
      %p154 = scmp.ne.s32.totalorder %s139, %s153
      %p155 = scmp.eq.s32.totalorder %s22, 0
      %p156 = por %p154, %p155
      %s158 = sadd.s32 %s157, 1
      %p161 = scmp.eq.s32.totalorder %s16, 3
      %p162 = scmp.ne.s32.totalorder %s157, %s159
      %p163 = scmp.eq.s32.totalorder %s16, 0
      %p164 = por %p162, %p163
      %p165 = scmp.ne.s32.totalorder %s157, %s159
      %p166 = scmp.eq.s32.totalorder %s21, 3
      %p167 = por %p165, %p166
      %p168 = scmp.ne.s32.totalorder %s159, %s160
      %p169 = scmp.eq.s32.totalorder %s21, 0
      %p170 = por %p168, %p169
      %p171 = scmp.ne.s32.totalorder %s159, %s160
      %p172 = scmp.eq.s32.totalorder %s22, 3
      %p173 = por %p171, %p172
      %p175 = scmp.ne.s32.totalorder %s160, %s174
      %p176 = scmp.eq.s32.totalorder %s22, 0
      %p177 = por %p175, %p176
      %s179 = sadd.s32 %s178, 1
      %p182 = scmp.eq.s32.totalorder %s16, 3
      %p183 = scmp.ne.s32.totalorder %s178, %s180
      %p184 = scmp.eq.s32.totalorder %s16, 0
      %p185 = por %p183, %p184
      %p186 = scmp.ne.s32.totalorder %s178, %s180
      %p187 = scmp.eq.s32.totalorder %s21, 3
      %p188 = por %p186, %p187
      %p189 = scmp.ne.s32.totalorder %s180, %s181
      %p190 = scmp.eq.s32.totalorder %s21, 0
      %p191 = por %p189, %p190
      %p192 = scmp.ne.s32.totalorder %s180, %s181
      %p193 = scmp.eq.s32.totalorder %s22, 3
      %p194 = por %p192, %p193
      %p196 = scmp.ne.s32.totalorder %s181, %s195
      %p197 = scmp.eq.s32.totalorder %s22, 0
      %p198 = por %p196, %p197
      %s200 = sadd.s32 %s199, 1
      %p203 = scmp.eq.s32.totalorder %s16, 3
      %p204 = scmp.ne.s32.totalorder %s199, %s201
      %p205 = scmp.eq.s32.totalorder %s16, 0
      %p206 = por %p204, %p205
      %p207 = scmp.ne.s32.totalorder %s199, %s201
      %p208 = scmp.eq.s32.totalorder %s21, 3
      %p209 = por %p207, %p208
      %p210 = scmp.ne.s32.totalorder %s201, %s202
      %p211 = scmp.eq.s32.totalorder %s21, 0
      %p212 = por %p210, %p211
      %p213 = scmp.ne.s32.totalorder %s201, %s202
      %p214 = scmp.eq.s32.totalorder %s22, 3
      %p215 = por %p213, %p214
      %p217 = scmp.ne.s32.totalorder %s202, %s216
      %p218 = scmp.eq.s32.totalorder %s22, 0
      %p219 = por %p217, %p218
      %s220 = ssub.s32 %s23, %s35
      %s221 = ssub.s32 %s24, %s31
      %s222 = sor.u32 %s220, %s221
      %p223 = scmp.eq.s32.totalorder %s222, 0
      %s225 = sadd.s32 %s224, 1
      %s226 = scalar_select %p223, %s224, %s225
      %p229 = pneg %p223
      %p230 = scmp.eq.s32.totalorder %s16, 3
      %p231 = por %p229, %p230
      %p232 = scmp.ne.s32.totalorder %s224, %s227
      %p233 = scmp.eq.s32.totalorder %s16, 0
      %p234 = por %p232, %p233
      %p235 = scmp.ne.s32.totalorder %s224, %s227
      %p236 = scmp.eq.s32.totalorder %s21, 3
      %p237 = por %p235, %p236
      %p238 = scmp.ne.s32.totalorder %s227, %s228
      %p239 = scmp.eq.s32.totalorder %s21, 0
      %p240 = por %p238, %p239
      %p241 = scmp.ne.s32.totalorder %s227, %s228
      %p242 = scmp.eq.s32.totalorder %s22, 3
      %p243 = por %p241, %p242
      %p245 = scmp.ne.s32.totalorder %s228, %s244
      %p246 = scmp.eq.s32.totalorder %s22, 0
      %p247 = por %p245, %p246
      %p248 = scmp.le.s32.totalorder 1, %s16
      %p249 = scmp.lt.s32.totalorder %s16, 5
      %p250 = pnand %p248, %p249
      %p251 = pneg %p250
      // Predicated region
      $region9: #{tpu_custom_call.1} parent=5 // pred_check
        _
      $region10: #{tpu_custom_call.1} parent=5 // pred_check_branch
        %253 = sbr.rel (%p250) target = $region12
      $region11: #{tpu_custom_call.1} parent=5 // pred_region
        %s254 = ssub.s32 %s16, 1
        // Predicated region
        $region13: #{tpu_custom_call.1} parent=11 // pred_check
          %p255 = pneg %p149
        $region14: #{tpu_custom_call.1} parent=11 // pred_check_branch
          %257 = sbr.rel (%p255) target = $region16
        $region15: #{tpu_custom_call.1} parent=11 // pred_region
          _
        $region16: #{tpu_custom_call.1} parent=11 // pred_fallthru
          _
        // Predicated region
        $region17: #{tpu_custom_call.1} parent=11 // pred_check
          %p258 = pneg %p170
        $region18: #{tpu_custom_call.1} parent=11 // pred_check_branch
          %260 = sbr.rel (%p258) target = $region20
        $region19: #{tpu_custom_call.1} parent=11 // pred_region
          _
        $region20: #{tpu_custom_call.1} parent=11 // pred_fallthru
          _
        // Predicated region
        $region21: #{tpu_custom_call.1} parent=11 // pred_check
          %p261 = pneg %p191
        $region22: #{tpu_custom_call.1} parent=11 // pred_check_branch
          %263 = sbr.rel (%p261) target = $region24
        $region23: #{tpu_custom_call.1} parent=11 // pred_region
          _
        $region24: #{tpu_custom_call.1} parent=11 // pred_fallthru
          _
        // Predicated region
        $region25: #{tpu_custom_call.1} parent=11 // pred_check
          %p264 = pneg %p212
        $region26: #{tpu_custom_call.1} parent=11 // pred_check_branch
          %266 = sbr.rel (%p264) target = $region28
        $region27: #{tpu_custom_call.1} parent=11 // pred_region
          _
        $region28: #{tpu_custom_call.1} parent=11 // pred_fallthru
          _
      $region12: #{tpu_custom_call.1} parent=5 // pred_fallthru
        _
      %p267 = scmp.lt.s32.totalorder %s16, 4
      // Predicated region
      $region29: #{tpu_custom_call.1} parent=5 // pred_check
        %p268 = pneg %p267
      $region30: #{tpu_custom_call.1} parent=5 // pred_check_branch
        %270 = sbr.rel (%p268) target = $region32
      $region31: #{tpu_custom_call.1} parent=5 // pred_region
        // Predicated region
        $region33: #{tpu_custom_call.1} parent=31 // pred_check
          %p271 = pneg %p58
        $region34: #{tpu_custom_call.1} parent=31 // pred_check_branch
          %273 = sbr.rel (%p271) target = $region36
        $region35: #{tpu_custom_call.1} parent=31 // pred_region
          %s274 = smul.u32 %s24, 8
          %s275 = ssub.s32 %s274, 1
          %p276 = scmp.gt.s32.totalorder %s275, 0
          %s277 = scalar_select %p276, %s275, 0
          %p278 = scmp.lt.s32.totalorder %s23, 1
          %s279 = scalar_select %p278, %s23, 1
          %p280 = scmp.lt.s32.totalorder %s277, 15
          %s281 = scalar_select %p280, %s277, 15
          %s282 = smul.addr %s281, 2
          %s283 = smul.addr %s279, 32
          %s284 = sadd.s32 %s282, %s283
          %s285 = smul.addr %s284, 8
          %s286 = scalar_lea.vmem %s0, %s285
          %s287 = smul.u32 %s24, 8
          %s288 = ssub.s32 %s287, 1
          %p289 = scmp.gt.s32.totalorder %s288, 0
          %s290 = scalar_select %p289, %s288, 0
        $region36: #{tpu_custom_call.1} parent=31 // pred_fallthru
          _
        // Predicated region
        $region37: #{tpu_custom_call.1} parent=31 // pred_check
          %p291 = pneg %p86
        $region38: #{tpu_custom_call.1} parent=31 // pred_check_branch
          %293 = sbr.rel (%p291) target = $region40
        $region39: #{tpu_custom_call.1} parent=31 // pred_region
          %s294 = smul.u32 8, %s24
          %p295 = scmp.lt.s32.totalorder %s23, 1
          %s296 = scalar_select %p295, %s23, 1
          %p297 = scmp.lt.s32.totalorder %s294, 15
          %s298 = scalar_select %p297, %s294, 15
          %s299 = smul.addr %s298, 2
          %s300 = smul.addr %s296, 32
          %s301 = sadd.s32 %s299, %s300
          %s302 = smul.addr %s301, 8
          %s303 = scalar_lea.vmem %s1, %s302
          %s304 = smul.u32 8, %s24
        $region40: #{tpu_custom_call.1} parent=31 // pred_fallthru
          _
        // Predicated region
        $region41: #{tpu_custom_call.1} parent=31 // pred_check
          %p305 = pneg %p122
        $region42: #{tpu_custom_call.1} parent=31 // pred_check_branch
          %307 = sbr.rel (%p305) target = $region44
        $region43: #{tpu_custom_call.1} parent=31 // pred_region
          %s308 = sadd.s32 %s24, 1
          %s309 = smul.u32 %s308, 8
          %p310 = scmp.lt.s32.totalorder %s309, 15
          %s311 = scalar_select %p310, %s309, 15
          %p312 = scmp.lt.s32.totalorder %s23, 1
          %s313 = scalar_select %p312, %s23, 1
          %p314 = scmp.lt.s32.totalorder %s311, 15
          %s315 = scalar_select %p314, %s311, 15
          %s316 = smul.addr %s315, 2
          %s317 = smul.addr %s313, 32
          %s318 = sadd.s32 %s316, %s317
          %s319 = smul.addr %s318, 8
          %s320 = scalar_lea.vmem %s2, %s319
          %s321 = sadd.s32 %s24, 1
          %s322 = smul.u32 %s321, 8
          %p323 = scmp.lt.s32.totalorder %s322, 15
          %s324 = scalar_select %p323, %s322, 15
        $region44: #{tpu_custom_call.1} parent=31 // pred_fallthru
          _
      $region32: #{tpu_custom_call.1} parent=5 // pred_fallthru
        _
      %p325 = scmp.le.s32.totalorder 1, %s16
      %p326 = scmp.lt.s32.totalorder %s16, 5
      %p327 = pnand %p325, %p326
      %p328 = pneg %p327
      // Predicated region
      $region45: #{tpu_custom_call.1} parent=5 // pred_check
        _
      $region46: #{tpu_custom_call.1} parent=5 // pred_check_branch
        %330 = sbr.rel (%p327) target = $region48
      $region47: #{tpu_custom_call.1} parent=5 // pred_region
        %s331 = ssub.s32 %s16, 1
        %s332 = smul.u32 %s26, 8
        %s333 = ssub.s32 %s332, 1
        %p334 = scmp.gt.s32.totalorder %s333, 0
        %s335 = scalar_select %p334, %s333, 0
        %p336 = scmp.lt.s32.totalorder %s25, 1
        %s337 = scalar_select %p336, %s25, 1
        %p338 = scmp.lt.s32.totalorder %s335, 15
        %s339 = scalar_select %p338, %s335, 15
        %s340 = smul.addr %s339, 2
        %s341 = smul.addr %s337, 32
        %s342 = sadd.s32 %s340, %s341
        %s343 = smul.addr %s342, 8
        %s344 = scalar_lea.vmem %s0, %s343
        %p345 = pneg %p64
        %p346 = pneg %p61
        %s347 = smul.u32 8, %s26
        %p348 = scmp.lt.s32.totalorder %s25, 1
        %s349 = scalar_select %p348, %s25, 1
        %p350 = scmp.lt.s32.totalorder %s347, 15
        %s351 = scalar_select %p350, %s347, 15
        %s352 = smul.addr %s351, 2
        %s353 = smul.addr %s349, 32
        %s354 = sadd.s32 %s352, %s353
        %s355 = smul.addr %s354, 8
        %s356 = scalar_lea.vmem %s1, %s355
        %p357 = pneg %p92
        %p358 = pneg %p89
        %s359 = sadd.s32 %s26, 1
        %s360 = smul.u32 %s359, 8
        %p361 = scmp.lt.s32.totalorder %s360, 15
        %s362 = scalar_select %p361, %s360, 15
        %p363 = scmp.lt.s32.totalorder %s25, 1
        %s364 = scalar_select %p363, %s25, 1
        %p365 = scmp.lt.s32.totalorder %s362, 15
        %s366 = scalar_select %p365, %s362, 15
        %s367 = smul.addr %s366, 2
        %s368 = smul.addr %s364, 32
        %s369 = sadd.s32 %s367, %s368
        %s370 = smul.addr %s369, 8
        %s371 = scalar_lea.vmem %s2, %s370
        %p372 = pneg %p128
        %p373 = pneg %p125
        %p374 = pneg %p149
        %p375 = pneg %p146
        %p376 = pneg %p170
        %p377 = pneg %p167
        %p378 = pneg %p191
        %p379 = pneg %p188
        %p380 = pneg %p212
        %p381 = pneg %p209
        %p382 = pneg %p240
        %p383 = pneg %p237
        %s384 = sand.u32 %s227, 1
        %s385 = scalar_lea.sflag [#allocation3], %s384
        %s386 = sand.u32 %s227, 1
        %s387 = smul.addr %s386, 8
        %s388 = scalar_lea.vmem [#allocation2], %s387
        %s389 = smul.u32 %s26, 8
        %s390 = ssub.s32 %s389, 1
        %p391 = scmp.gt.s32.totalorder %s390, 0
        %s392 = scalar_select %p391, %s390, 0
        %p393 = scmp.lt.s32.totalorder %s25, 1
        %s394 = scalar_select %p393, %s25, 1
        %p395 = scmp.lt.s32.totalorder %s392, 15
        %s396 = scalar_select %p395, %s392, 15
        %s397 = smul.addr %s396, 2
        %s398 = smul.addr %s394, 32
        %s399 = sadd.s32 %s397, %s398
        %s400 = smul.addr %s399, 8
        %s401 = scalar_lea.vmem %s0, %s400
        %s402 = smul.u32 %s26, 8
        %s403 = ssub.s32 %s402, 1
        %p404 = scmp.gt.s32.totalorder %s403, 0
        %s405 = scalar_select %p404, %s403, 0
        %s406 = smul.u32 8, %s26
        %p407 = scmp.lt.s32.totalorder %s25, 1
        %s408 = scalar_select %p407, %s25, 1
        %p409 = scmp.lt.s32.totalorder %s406, 15
        %s410 = scalar_select %p409, %s406, 15
        %s411 = smul.addr %s410, 2
        %s412 = smul.addr %s408, 32
        %s413 = sadd.s32 %s411, %s412
        %s414 = smul.addr %s413, 8
        %s415 = scalar_lea.vmem %s1, %s414
        %s416 = smul.u32 8, %s26
        %s417 = sadd.s32 %s26, 1
        %s418 = smul.u32 %s417, 8
        %p419 = scmp.lt.s32.totalorder %s418, 15
        %s420 = scalar_select %p419, %s418, 15
        %p421 = scmp.lt.s32.totalorder %s25, 1
        %s422 = scalar_select %p421, %s25, 1
        %p423 = scmp.lt.s32.totalorder %s420, 15
        %s424 = scalar_select %p423, %s420, 15
        %s425 = smul.addr %s424, 2
        %s426 = smul.addr %s422, 32
        %s427 = sadd.s32 %s425, %s426
        %s428 = smul.addr %s427, 8
        %s429 = scalar_lea.vmem %s2, %s428
        %s430 = sadd.s32 %s26, 1
        %s431 = smul.u32 %s430, 8
        %p432 = scmp.lt.s32.totalorder %s431, 15
        %s433 = scalar_select %p432, %s431, 15
        %v434 = vld [vmem:[%s401] sm:$0xff]
        %v435 = vld [vmem:[%s401 + $0x8] sm:$0xff]
        %v436 = vld [vmem:[%s415] sm:$0xff]
        %v437 = vld [vmem:[%s415 + $0x8] sm:$0xff]
        %v438 = vld [vmem:[%s415 + $0x10] sm:$0xff]
        %v439 = vld [vmem:[%s415 + $0x18] sm:$0xff]
        %v440 = vld [vmem:[%s415 + $0x20] sm:$0xff]
        %v441 = vld [vmem:[%s415 + $0x28] sm:$0xff]
        %v442 = vld [vmem:[%s415 + $0x30] sm:$0xff]
        %v443 = vld [vmem:[%s415 + $0x38] sm:$0xff]
        %v444 = vld [vmem:[%s415 + $0x40] sm:$0xff]
        %v445 = vld [vmem:[%s415 + $0x48] sm:$0xff]
        %v446 = vld [vmem:[%s415 + $0x50] sm:$0xff]
        %v447 = vld [vmem:[%s415 + $0x58] sm:$0xff]
        %v448 = vld [vmem:[%s415 + $0x60] sm:$0xff]
        %v449 = vld [vmem:[%s415 + $0x68] sm:$0xff]
        %v450 = vld [vmem:[%s415 + $0x70] sm:$0xff]
        %v451 = vld [vmem:[%s415 + $0x78] sm:$0xff]
        %v452 = vld [vmem:[%s429] sm:$0xff]
        %v453 = vld [vmem:[%s429 + $0x8] sm:$0xff]
        %v454 = vld [vmem:[%s3] sm:$0xff]
        %v455 = vld [vmem:[%s4] sm:$0x1]
        %v457 = vlaneseq
        %v458 = vshrl.u32 %v457, 7
        %v459 = vsub.s32 0, %v458
        %v460 = vrot.slane %v455, %v459
        %vm462 = vcmask 64512
        %v464 = vsel %vm462, %v434, 0
        %v467 = vsel %vm462, %v435, 0
        %v470 = vsel %vm462, %v436, 0
        %v473 = vsel %vm462, %v437, 0
        %v476 = vsel %vm462, %v438, 0
        %v479 = vsel %vm462, %v439, 0
        %v482 = vsel %vm462, %v440, 0
        %v485 = vsel %vm462, %v441, 0
        %v488 = vsel %vm462, %v442, 0
        %v491 = vsel %vm462, %v443, 0
        %v494 = vsel %vm462, %v444, 0
        %v497 = vsel %vm462, %v445, 0
        %v500 = vsel %vm462, %v446, 0
        %v503 = vsel %vm462, %v447, 0
        %v506 = vsel %vm462, %v448, 0
        %v509 = vsel %vm462, %v449, 0
        %v512 = vsel %vm462, %v450, 0
        %v515 = vsel %vm462, %v451, 0
        %v518 = vsel %vm462, %v452, 0
        %v521 = vsel %vm462, %v453, 0
        %523 = vmatprep.subr.mxu0 0.0
        %524 = vmatpush1.msra.mxu0 0.0
        %525 = vmatprep.subr.mxu0 0.0
        %526 = vmatpush1.msra.mxu0 0.0
        %527 = vmatprep.subr.mxu0 0.0
        %528 = vmatpush1.msra.mxu0 0.0
        %529 = vmatprep.subr.mxu0 0.0
        %530 = vmatpush1.msra.mxu0 0.0
        %531 = vmatprep.subr.mxu0 0.0
        %532 = vmatpush1.msra.mxu0 0.0
        %533 = vmatprep.subr.mxu0 0.0
        %534 = vmatpush1.msra.mxu0 0.0
        %535 = vmatprep.subr.mxu0 0.0
        %536 = vmatpush1.msra.mxu0 0.0
        %537 = vmatprep.subr.mxu0 0.0
        %538 = vmatpush1.msra.mxu0 0.0
        %539 = vmatprep.subr.mxu0 0.0
        %540 = vmatpush1.msra.mxu0 0.0
        %541 = vmatprep.subr.mxu0 0.0
        %542 = vmatpush1.msra.mxu0 0.0
        %543 = vmatprep.subr.mxu0 0.0
        %544 = vmatpush1.msra.mxu0 0.0
        %545 = vmatprep.subr.mxu0 0.0
        %546 = vmatpush1.msra.mxu0 0.0
        %547 = vmatprep.subr.mxu0 0.0
        %548 = vmatpush1.msra.mxu0 0.0
        %549 = vmatprep.subr.mxu0 0.0
        %550 = vmatpush1.msra.mxu0 0.0
        %551 = vmatprep.subr.mxu0 0.0
        %552 = vmatpush1.msra.mxu0 0.0
        %553 = vmatprep.subr.mxu0 0.0
        %554 = vmatpush1.msra.mxu0 %v454
        %555 = vmatprep.subr.mxu0 0.0
        %556 = vmatpush2.msra.mxu0 0.0
        %557 = vmatprep.subr.mxu0 0.0
        %558 = vmatpush2.msra.mxu0 0.0
        %559 = vmatprep.subr.mxu0 0.0
        %560 = vmatpush2.msra.mxu0 0.0
        %561 = vmatprep.subr.mxu0 0.0
        %562 = vmatpush2.msra.mxu0 0.0
        %563 = vmatprep.subr.mxu0 0.0
        %564 = vmatpush2.msra.mxu0 0.0
        %565 = vmatprep.subr.mxu0 0.0
        %566 = vmatpush2.msra.mxu0 0.0
        %567 = vmatprep.subr.mxu0 0.0
        %568 = vmatpush2.msra.mxu0 0.0
        %569 = vmatprep.subr.mxu0 0.0
        %570 = vmatpush2.msra.mxu0 0.0
        %571 = vmatprep.subr.mxu0 0.0
        %572 = vmatpush2.msra.mxu0 0.0
        %573 = vmatprep.subr.mxu0 0.0
        %574 = vmatpush2.msra.mxu0 0.0
        %575 = vmatprep.subr.mxu0 0.0
        %576 = vmatpush2.msra.mxu0 0.0
        %577 = vmatprep.subr.mxu0 0.0
        %578 = vmatpush2.msra.mxu0 0.0
        %579 = vmatprep.subr.mxu0 0.0
        %580 = vmatpush2.msra.mxu0 0.0
        %581 = vmatprep.subr.mxu0 0.0
        %582 = vmatpush2.msra.mxu0 0.0
        %583 = vmatprep.subr.mxu0 0.0
        %584 = vmatpush2.msra.mxu0 0.0
        %585 = vmatprep.subr.mxu0 0.0
        %586 = vmatpush2.msra.mxu0 0.0
        %587 = vmatprep.mubr.f32.mxu0 0.0
        %588 = vmatmul.mubr.f32.gmra.mxu0 %v464
        %v589 = vpop.f32.mrf.mxu0
        %v590 = vadd.f32 %v460, %v589
        %v591 = vpop.f32.mrf.mxu0
        %592 = vmatprep.mubr.f32.mxu0 0.0
        %593 = vmatmul.mubr.f32.gmra.mxu0 %v467
        %v594 = vpop.f32.mrf.mxu0
        %v595 = vadd.f32 %v460, %v594
        %v596 = vpop.f32.mrf.mxu0
        %597 = vmatprep.mubr.f32.mxu0 0.0
        %598 = vmatmul.mubr.f32.gmra.mxu0 %v470
        %v599 = vpop.f32.mrf.mxu0
        %v600 = vadd.f32 %v460, %v599
        %v601 = vpop.f32.mrf.mxu0
        %602 = vmatprep.mubr.f32.mxu0 0.0
        %603 = vmatmul.mubr.f32.gmra.mxu0 %v473
        %v604 = vpop.f32.mrf.mxu0
        %v605 = vadd.f32 %v460, %v604
        %v606 = vpop.f32.mrf.mxu0
        %607 = vmatprep.mubr.f32.mxu0 0.0
        %608 = vmatmul.mubr.f32.gmra.mxu0 %v476
        %v609 = vpop.f32.mrf.mxu0
        %v610 = vadd.f32 %v460, %v609
        %v611 = vpop.f32.mrf.mxu0
        %612 = vmatprep.mubr.f32.mxu0 0.0
        %613 = vmatmul.mubr.f32.gmra.mxu0 %v479
        %v614 = vpop.f32.mrf.mxu0
        %v615 = vadd.f32 %v460, %v614
        %v616 = vpop.f32.mrf.mxu0
        %617 = vmatprep.mubr.f32.mxu0 0.0
        %618 = vmatmul.mubr.f32.gmra.mxu0 %v482
        %v619 = vpop.f32.mrf.mxu0
        %v620 = vadd.f32 %v460, %v619
        %v621 = vpop.f32.mrf.mxu0
        %622 = vmatprep.mubr.f32.mxu0 0.0
        %623 = vmatmul.mubr.f32.gmra.mxu0 %v485
        %v624 = vpop.f32.mrf.mxu0
        %v625 = vadd.f32 %v460, %v624
        %v626 = vpop.f32.mrf.mxu0
        %627 = vmatprep.mubr.f32.mxu0 0.0
        %628 = vmatmul.mubr.f32.gmra.mxu0 %v488
        %v629 = vpop.f32.mrf.mxu0
        %v630 = vadd.f32 %v460, %v629
        %v631 = vpop.f32.mrf.mxu0
        %632 = vmatprep.mubr.f32.mxu0 0.0
        %633 = vmatmul.mubr.f32.gmra.mxu0 %v491
        %v634 = vpop.f32.mrf.mxu0
        %v635 = vadd.f32 %v460, %v634
        %v636 = vpop.f32.mrf.mxu0
        %637 = vmatprep.mubr.f32.mxu0 0.0
        %638 = vmatmul.mubr.f32.gmra.mxu0 %v494
        %v639 = vpop.f32.mrf.mxu0
        %v640 = vadd.f32 %v460, %v639
        %v641 = vpop.f32.mrf.mxu0
        %642 = vmatprep.mubr.f32.mxu0 0.0
        %643 = vmatmul.mubr.f32.gmra.mxu0 %v497
        %v644 = vpop.f32.mrf.mxu0
        %v645 = vadd.f32 %v460, %v644
        %v646 = vpop.f32.mrf.mxu0
        %647 = vmatprep.mubr.f32.mxu0 0.0
        %648 = vmatmul.mubr.f32.gmra.mxu0 %v500
        %v649 = vpop.f32.mrf.mxu0
        %v650 = vadd.f32 %v460, %v649
        %v651 = vpop.f32.mrf.mxu0
        %652 = vmatprep.mubr.f32.mxu0 0.0
        %653 = vmatmul.mubr.f32.gmra.mxu0 %v503
        %v654 = vpop.f32.mrf.mxu0
        %v655 = vadd.f32 %v460, %v654
        %v656 = vpop.f32.mrf.mxu0
        %657 = vmatprep.mubr.f32.mxu0 0.0
        %658 = vmatmul.mubr.f32.gmra.mxu0 %v506
        %v659 = vpop.f32.mrf.mxu0
        %v660 = vadd.f32 %v460, %v659
        %v661 = vpop.f32.mrf.mxu0
        %662 = vmatprep.mubr.f32.mxu0 0.0
        %663 = vmatmul.mubr.f32.gmra.mxu0 %v509
        %v664 = vpop.f32.mrf.mxu0
        %v665 = vadd.f32 %v460, %v664
        %v666 = vpop.f32.mrf.mxu0
        %667 = vmatprep.mubr.f32.mxu0 0.0
        %668 = vmatmul.mubr.f32.gmra.mxu0 %v512
        %v669 = vpop.f32.mrf.mxu0
        %v670 = vadd.f32 %v460, %v669
        %v671 = vpop.f32.mrf.mxu0
        %672 = vmatprep.mubr.f32.mxu0 0.0
        %673 = vmatmul.mubr.f32.gmra.mxu0 %v515
        %v674 = vpop.f32.mrf.mxu0
        %v675 = vadd.f32 %v460, %v674
        %v676 = vpop.f32.mrf.mxu0
        %677 = vmatprep.mubr.f32.mxu0 0.0
        %678 = vmatmul.mubr.f32.gmra.mxu0 %v518
        %v679 = vpop.f32.mrf.mxu0
        %v680 = vadd.f32 %v460, %v679
        %v681 = vpop.f32.mrf.mxu0
        %682 = vmatprep.mubr.f32.mxu0 0.0
        %683 = vmatmul.mubr.f32.gmra.mxu0 %v521
        %v684 = vpop.f32.mrf.mxu0
        %v685 = vadd.f32 %v460, %v684
        %v686 = vpop.f32.mrf.mxu0
        %687 = vdwg.mxu0
        %v688 = vxor.u32 %v590, 2147483648
        %v689 = vxor.u32 %v595, 2147483648
        %v690 = vxor.u32 %v600, 2147483648
        %v691 = vxor.u32 %v605, 2147483648
        %v692 = vxor.u32 %v610, 2147483648
        %v693 = vxor.u32 %v615, 2147483648
        %v694 = vxor.u32 %v620, 2147483648
        %v695 = vxor.u32 %v625, 2147483648
        %v696 = vxor.u32 %v630, 2147483648
        %v697 = vxor.u32 %v635, 2147483648
        %v698 = vxor.u32 %v640, 2147483648
        %v699 = vxor.u32 %v645, 2147483648
        %v700 = vxor.u32 %v650, 2147483648
        %v701 = vxor.u32 %v655, 2147483648
        %v702 = vxor.u32 %v660, 2147483648
        %v703 = vxor.u32 %v665, 2147483648
        %v704 = vxor.u32 %v670, 2147483648
        %v705 = vxor.u32 %v675, 2147483648
        %v706 = vxor.u32 %v680, 2147483648
        %v707 = vxor.u32 %v685, 2147483648
        %v708 = vmul.f32 %v688, 1.442695
        %v709 = vpow.pop %v708
        %v710 = vmul.f32 %v689, 1.442695
        %v711 = vpow.pop %v710
        %v712 = vmul.f32 %v690, 1.442695
        %v713 = vpow.pop %v712
        %v714 = vmul.f32 %v691, 1.442695
        %v715 = vpow.pop %v714
        %v716 = vmul.f32 %v692, 1.442695
        %v717 = vpow.pop %v716
        %v718 = vmul.f32 %v693, 1.442695
        %v719 = vpow.pop %v718
        %v720 = vmul.f32 %v694, 1.442695
        %v721 = vpow.pop %v720
        %v722 = vmul.f32 %v695, 1.442695
        %v723 = vpow.pop %v722
        %v724 = vmul.f32 %v696, 1.442695
        %v725 = vpow.pop %v724
        %v726 = vmul.f32 %v697, 1.442695
        %v727 = vpow.pop %v726
        %v728 = vmul.f32 %v698, 1.442695
        %v729 = vpow.pop %v728
        %v730 = vmul.f32 %v699, 1.442695
        %v731 = vpow.pop %v730
        %v732 = vmul.f32 %v700, 1.442695
        %v733 = vpow.pop %v732
        %v734 = vmul.f32 %v701, 1.442695
        %v735 = vpow.pop %v734
        %v736 = vmul.f32 %v702, 1.442695
        %v737 = vpow.pop %v736
        %v738 = vmul.f32 %v703, 1.442695
        %v739 = vpow.pop %v738
        %v740 = vmul.f32 %v704, 1.442695
        %v741 = vpow.pop %v740
        %v742 = vmul.f32 %v705, 1.442695
        %v743 = vpow.pop %v742
        %v744 = vmul.f32 %v706, 1.442695
        %v745 = vpow.pop %v744
        %v746 = vmul.f32 %v707, 1.442695
        %v747 = vpow.pop %v746
        %v748 = vadd.f32 %v709, 1.0
        %v749 = vadd.f32 %v711, 1.0
        %v750 = vadd.f32 %v713, 1.0
        %v751 = vadd.f32 %v715, 1.0
        %v752 = vadd.f32 %v717, 1.0
        %v753 = vadd.f32 %v719, 1.0
        %v754 = vadd.f32 %v721, 1.0
        %v755 = vadd.f32 %v723, 1.0
        %v756 = vadd.f32 %v725, 1.0
        %v757 = vadd.f32 %v727, 1.0
        %v758 = vadd.f32 %v729, 1.0
        %v759 = vadd.f32 %v731, 1.0
        %v760 = vadd.f32 %v733, 1.0
        %v761 = vadd.f32 %v735, 1.0
        %v762 = vadd.f32 %v737, 1.0
        %v763 = vadd.f32 %v739, 1.0
        %v764 = vadd.f32 %v741, 1.0
        %v765 = vadd.f32 %v743, 1.0
        %v766 = vadd.f32 %v745, 1.0
        %v767 = vadd.f32 %v747, 1.0
        %v768 = vrcp.pop %v748
        %v769 = vmul.f32 1.0, %v768
        %v770 = vrcp.pop %v749
        %v771 = vmul.f32 1.0, %v770
        %v772 = vrcp.pop %v750
        %v773 = vmul.f32 1.0, %v772
        %v774 = vrcp.pop %v751
        %v775 = vmul.f32 1.0, %v774
        %v776 = vrcp.pop %v752
        %v777 = vmul.f32 1.0, %v776
        %v778 = vrcp.pop %v753
        %v779 = vmul.f32 1.0, %v778
        %v780 = vrcp.pop %v754
        %v781 = vmul.f32 1.0, %v780
        %v782 = vrcp.pop %v755
        %v783 = vmul.f32 1.0, %v782
        %v784 = vrcp.pop %v756
        %v785 = vmul.f32 1.0, %v784
        %v786 = vrcp.pop %v757
        %v787 = vmul.f32 1.0, %v786
        %v788 = vrcp.pop %v758
        %v789 = vmul.f32 1.0, %v788
        %v790 = vrcp.pop %v759
        %v791 = vmul.f32 1.0, %v790
        %v792 = vrcp.pop %v760
        %v793 = vmul.f32 1.0, %v792
        %v794 = vrcp.pop %v761
        %v795 = vmul.f32 1.0, %v794
        %v796 = vrcp.pop %v762
        %v797 = vmul.f32 1.0, %v796
        %v798 = vrcp.pop %v763
        %v799 = vmul.f32 1.0, %v798
        %v800 = vrcp.pop %v764
        %v801 = vmul.f32 1.0, %v800
        %v802 = vrcp.pop %v765
        %v803 = vmul.f32 1.0, %v802
        %v804 = vrcp.pop %v766
        %v805 = vmul.f32 1.0, %v804
        %v806 = vrcp.pop %v767
        %v807 = vmul.f32 1.0, %v806
        %v808 = vmul.f32 %v590, %v769
        %v809 = vmul.f32 %v595, %v771
        %v810 = vmul.f32 %v600, %v773
        %v811 = vmul.f32 %v605, %v775
        %v812 = vmul.f32 %v610, %v777
        %v813 = vmul.f32 %v615, %v779
        %v814 = vmul.f32 %v620, %v781
        %v815 = vmul.f32 %v625, %v783
        %v816 = vmul.f32 %v630, %v785
        %v817 = vmul.f32 %v635, %v787
        %v818 = vmul.f32 %v640, %v789
        %v819 = vmul.f32 %v645, %v791
        %v820 = vmul.f32 %v650, %v793
        %v821 = vmul.f32 %v655, %v795
        %v822 = vmul.f32 %v660, %v797
        %v823 = vmul.f32 %v665, %v799
        %v824 = vmul.f32 %v670, %v801
        %v825 = vmul.f32 %v675, %v803
        %v826 = vmul.f32 %v680, %v805
        %v827 = vmul.f32 %v685, %v807
        %v828 = vlaneseq
        %v829 = vshrl.u32 %v828, 7
        %v830 = vadd.s32 %v829, 8
        %v831 = vadd.s32 %v829, 16
        %v832 = vadd.s32 %v829, 24
        %v833 = vadd.s32 %v829, 32
        %v834 = vadd.s32 %v829, 40
        %v835 = vadd.s32 %v829, 48
        %v836 = vadd.s32 %v829, 56
        %v837 = vadd.s32 %v829, 64
        %v838 = vadd.s32 %v829, 72
        %v839 = vadd.s32 %v829, 80
        %v840 = vadd.s32 %v829, 88
        %v841 = vadd.s32 %v829, 96
        %v842 = vadd.s32 %v829, 104
        %v843 = vadd.s32 %v829, 112
        %v844 = vadd.s32 %v829, 120
        %v845 = vadd.s32 %v829, 128
        %v846 = vadd.s32 %v829, 136
        %v847 = vadd.s32 %v829, 144
        %v848 = vadd.s32 %v829, 152
        %p849 = scmp.eq.s32.totalorder %s26, 0
        %vm850 = vcmp.lt.s32.totalorder %v829, 16
        %vm851 = vcmp.lt.s32.totalorder %v830, 16
        %vm852 = vcmp.lt.s32.totalorder %v831, 16
        %vm853 = vcmp.lt.s32.totalorder %v832, 16
        %vm854 = vcmp.lt.s32.totalorder %v833, 16
        %vm855 = vcmp.lt.s32.totalorder %v834, 16
        %vm856 = vcmp.lt.s32.totalorder %v835, 16
        %vm857 = vcmp.lt.s32.totalorder %v836, 16
        %vm858 = vcmp.lt.s32.totalorder %v837, 16
        %vm859 = vcmp.lt.s32.totalorder %v838, 16
        %vm860 = vcmp.lt.s32.totalorder %v839, 16
        %vm861 = vcmp.lt.s32.totalorder %v840, 16
        %vm862 = vcmp.lt.s32.totalorder %v841, 16
        %vm863 = vcmp.lt.s32.totalorder %v842, 16
        %vm864 = vcmp.lt.s32.totalorder %v843, 16
        %vm865 = vcmp.lt.s32.totalorder %v844, 16
        %vm866 = vcmp.lt.s32.totalorder %v845, 16
        %vm867 = vcmp.lt.s32.totalorder %v846, 16
        %vm868 = vcmp.lt.s32.totalorder %v847, 16
        %vm869 = vcmp.lt.s32.totalorder %v848, 16
        %s870 = scalar_select %p849, 1, 0
        %v871 = vstv %s870
        %vm872 = vcmp.eq.s32.totalorder %v871, 1
        %vm873 = vmand %vm872, %vm850
        %vm874 = vmand %vm872, %vm851
        %vm875 = vmand %vm872, %vm852
        %vm876 = vmand %vm872, %vm853
        %vm877 = vmand %vm872, %vm854
        %vm878 = vmand %vm872, %vm855
        %vm879 = vmand %vm872, %vm856
        %vm880 = vmand %vm872, %vm857
        %vm881 = vmand %vm872, %vm858
        %vm882 = vmand %vm872, %vm859
        %vm883 = vmand %vm872, %vm860
        %vm884 = vmand %vm872, %vm861
        %vm885 = vmand %vm872, %vm862
        %vm886 = vmand %vm872, %vm863
        %vm887 = vmand %vm872, %vm864
        %vm888 = vmand %vm872, %vm865
        %vm889 = vmand %vm872, %vm866
        %vm890 = vmand %vm872, %vm867
        %vm891 = vmand %vm872, %vm868
        %vm892 = vmand %vm872, %vm869
        %p893 = scmp.eq.s32.totalorder %s26, 1
        %vm894 = vcmp.ge.s32.totalorder %v829, 144
        %vm895 = vcmp.ge.s32.totalorder %v830, 144
        %vm896 = vcmp.ge.s32.totalorder %v831, 144
        %vm897 = vcmp.ge.s32.totalorder %v832, 144
        %vm898 = vcmp.ge.s32.totalorder %v833, 144
        %vm899 = vcmp.ge.s32.totalorder %v834, 144
        %vm900 = vcmp.ge.s32.totalorder %v835, 144
        %vm901 = vcmp.ge.s32.totalorder %v836, 144
        %vm902 = vcmp.ge.s32.totalorder %v837, 144
        %vm903 = vcmp.ge.s32.totalorder %v838, 144
        %vm904 = vcmp.ge.s32.totalorder %v839, 144
        %vm905 = vcmp.ge.s32.totalorder %v840, 144
        %vm906 = vcmp.ge.s32.totalorder %v841, 144
        %vm907 = vcmp.ge.s32.totalorder %v842, 144
        %vm908 = vcmp.ge.s32.totalorder %v843, 144
        %vm909 = vcmp.ge.s32.totalorder %v844, 144
        %vm910 = vcmp.ge.s32.totalorder %v845, 144
        %vm911 = vcmp.ge.s32.totalorder %v846, 144
        %vm912 = vcmp.ge.s32.totalorder %v847, 144
        %vm913 = vcmp.ge.s32.totalorder %v848, 144
        %s914 = scalar_select %p893, 1, 0
        %v915 = vstv %s914
        %vm916 = vcmp.eq.s32.totalorder %v915, 1
        %vm917 = vmand %vm916, %vm894
        %vm918 = vmand %vm916, %vm895
        %vm919 = vmand %vm916, %vm896
        %vm920 = vmand %vm916, %vm897
        %vm921 = vmand %vm916, %vm898
        %vm922 = vmand %vm916, %vm899
        %vm923 = vmand %vm916, %vm900
        %vm924 = vmand %vm916, %vm901
        %vm925 = vmand %vm916, %vm902
        %vm926 = vmand %vm916, %vm903
        %vm927 = vmand %vm916, %vm904
        %vm928 = vmand %vm916, %vm905
        %vm929 = vmand %vm916, %vm906
        %vm930 = vmand %vm916, %vm907
        %vm931 = vmand %vm916, %vm908
        %vm932 = vmand %vm916, %vm909
        %vm933 = vmand %vm916, %vm910
        %vm934 = vmand %vm916, %vm911
        %vm935 = vmand %vm916, %vm912
        %vm936 = vmand %vm916, %vm913
        %vm937 = vmor %vm873, %vm917
        %vm938 = vmor %vm874, %vm918
        %vm939 = vmor %vm875, %vm919
        %vm940 = vmor %vm876, %vm920
        %vm941 = vmor %vm877, %vm921
        %vm942 = vmor %vm878, %vm922
        %vm943 = vmor %vm879, %vm923
        %vm944 = vmor %vm880, %vm924
        %vm945 = vmor %vm881, %vm925
        %vm946 = vmor %vm882, %vm926
        %vm947 = vmor %vm883, %vm927
        %vm948 = vmor %vm884, %vm928
        %vm949 = vmor %vm885, %vm929
        %vm950 = vmor %vm886, %vm930
        %vm951 = vmor %vm887, %vm931
        %vm952 = vmor %vm888, %vm932
        %vm953 = vmor %vm889, %vm933
        %vm954 = vmor %vm890, %vm934
        %vm955 = vmor %vm891, %vm935
        %vm956 = vmor %vm892, %vm936
        %v957 = vsel %vm937, 1, 0
        %v958 = vsel %vm938, 1, 0
        %v959 = vsel %vm939, 1, 0
        %v960 = vsel %vm940, 1, 0
        %v961 = vsel %vm941, 1, 0
        %v962 = vsel %vm942, 1, 0
        %v963 = vsel %vm943, 1, 0
        %v964 = vsel %vm944, 1, 0
        %v965 = vsel %vm945, 1, 0
        %v966 = vsel %vm946, 1, 0
        %v967 = vsel %vm947, 1, 0
        %v968 = vsel %vm948, 1, 0
        %v969 = vsel %vm949, 1, 0
        %v970 = vsel %vm950, 1, 0
        %v971 = vsel %vm951, 1, 0
        %v972 = vsel %vm952, 1, 0
        %v973 = vsel %vm953, 1, 0
        %v974 = vsel %vm954, 1, 0
        %v975 = vsel %vm955, 1, 0
        %v976 = vsel %vm956, 1, 0
        %vm977 = vcmp.eq.s32.totalorder %v957, 1
        %vm978 = vcmp.eq.s32.totalorder %v958, 1
        %vm979 = vcmp.eq.s32.totalorder %v959, 1
        %vm980 = vcmp.eq.s32.totalorder %v960, 1
        %vm981 = vcmp.eq.s32.totalorder %v961, 1
        %vm982 = vcmp.eq.s32.totalorder %v962, 1
        %vm983 = vcmp.eq.s32.totalorder %v963, 1
        %vm984 = vcmp.eq.s32.totalorder %v964, 1
        %vm985 = vcmp.eq.s32.totalorder %v965, 1
        %vm986 = vcmp.eq.s32.totalorder %v966, 1
        %vm987 = vcmp.eq.s32.totalorder %v967, 1
        %vm988 = vcmp.eq.s32.totalorder %v968, 1
        %vm989 = vcmp.eq.s32.totalorder %v969, 1
        %vm990 = vcmp.eq.s32.totalorder %v970, 1
        %vm991 = vcmp.eq.s32.totalorder %v971, 1
        %vm992 = vcmp.eq.s32.totalorder %v972, 1
        %vm993 = vcmp.eq.s32.totalorder %v973, 1
        %vm994 = vcmp.eq.s32.totalorder %v974, 1
        %vm995 = vcmp.eq.s32.totalorder %v975, 1
        %vm996 = vcmp.eq.s32.totalorder %v976, 1
        %v997 = vsel %vm977, 0.0, %v808
        %v998 = vsel %vm978, 0.0, %v809
        %v999 = vsel %vm979, 0.0, %v810
        %v1000 = vsel %vm980, 0.0, %v811
        %v1001 = vsel %vm981, 0.0, %v812
        %v1002 = vsel %vm982, 0.0, %v813
        %v1003 = vsel %vm983, 0.0, %v814
        %v1004 = vsel %vm984, 0.0, %v815
        %v1005 = vsel %vm985, 0.0, %v816
        %v1006 = vsel %vm986, 0.0, %v817
        %v1007 = vsel %vm987, 0.0, %v818
        %v1008 = vsel %vm988, 0.0, %v819
        %v1009 = vsel %vm989, 0.0, %v820
        %v1010 = vsel %vm990, 0.0, %v821
        %v1011 = vsel %vm991, 0.0, %v822
        %v1012 = vsel %vm992, 0.0, %v823
        %v1013 = vsel %vm993, 0.0, %v824
        %v1014 = vsel %vm994, 0.0, %v825
        %v1015 = vsel %vm995, 0.0, %v826
        %v1016 = vsel %vm996, 0.0, %v827
        %1033 = vrot.lane.b32.xlu0 %v999, 4
        %v1034 = vpop.permute.xlu0 %1033
        %1035 = vrot.lane.b32.xlu0 %v1000, 4
        %v1036 = vpop.permute.xlu0 %1035
        %1037 = vrot.lane.b32.xlu0 %v1001, 4
        %v1038 = vpop.permute.xlu0 %1037
        %1039 = vrot.lane.b32.xlu0 %v1002, 4
        %v1040 = vpop.permute.xlu0 %1039
        %1041 = vrot.lane.b32.xlu0 %v1003, 4
        %v1042 = vpop.permute.xlu0 %1041
        %1043 = vrot.lane.b32.xlu0 %v1004, 4
        %v1044 = vpop.permute.xlu0 %1043
        %1045 = vrot.lane.b32.xlu0 %v1005, 4
        %v1046 = vpop.permute.xlu0 %1045
        %1047 = vrot.lane.b32.xlu0 %v1006, 4
        %v1048 = vpop.permute.xlu0 %1047
        %1049 = vrot.lane.b32.xlu0 %v1007, 4
        %v1050 = vpop.permute.xlu0 %1049
        %1051 = vrot.lane.b32.xlu0 %v1008, 4
        %v1052 = vpop.permute.xlu0 %1051
        %1053 = vrot.lane.b32.xlu0 %v1009, 4
        %v1054 = vpop.permute.xlu0 %1053
        %1055 = vrot.lane.b32.xlu0 %v1010, 4
        %v1056 = vpop.permute.xlu0 %1055
        %1057 = vrot.lane.b32.xlu0 %v1011, 4
        %v1058 = vpop.permute.xlu0 %1057
        %1059 = vrot.lane.b32.xlu0 %v1012, 4
        %v1060 = vpop.permute.xlu0 %1059
        %1061 = vrot.lane.b32.xlu0 %v1013, 4
        %v1062 = vpop.permute.xlu0 %1061
        %1063 = vrot.lane.b32.xlu0 %v1014, 4
        %v1064 = vpop.permute.xlu0 %1063
        %1083 = vrot.lane.b32.xlu0 %v1001, 8
        %v1084 = vpop.permute.xlu0 %1083
        %1085 = vrot.lane.b32.xlu0 %v1002, 8
        %v1086 = vpop.permute.xlu0 %1085
        %1087 = vrot.lane.b32.xlu0 %v1003, 8
        %v1088 = vpop.permute.xlu0 %1087
        %1089 = vrot.lane.b32.xlu0 %v1004, 8
        %v1090 = vpop.permute.xlu0 %1089
        %1091 = vrot.lane.b32.xlu0 %v1005, 8
        %v1092 = vpop.permute.xlu0 %1091
        %1093 = vrot.lane.b32.xlu0 %v1006, 8
        %v1094 = vpop.permute.xlu0 %1093
        %1095 = vrot.lane.b32.xlu0 %v1007, 8
        %v1096 = vpop.permute.xlu0 %1095
        %1097 = vrot.lane.b32.xlu0 %v1008, 8
        %v1098 = vpop.permute.xlu0 %1097
        %1099 = vrot.lane.b32.xlu0 %v1009, 8
        %v1100 = vpop.permute.xlu0 %1099
        %1101 = vrot.lane.b32.xlu0 %v1010, 8
        %v1102 = vpop.permute.xlu0 %1101
        %1103 = vrot.lane.b32.xlu0 %v1011, 8
        %v1104 = vpop.permute.xlu0 %1103
        %1105 = vrot.lane.b32.xlu0 %v1012, 8
        %v1106 = vpop.permute.xlu0 %1105
        %1107 = vrot.lane.b32.xlu0 %v1013, 8
        %v1108 = vpop.permute.xlu0 %1107
        %1109 = vrot.lane.b32.xlu0 %v1014, 8
        %v1110 = vpop.permute.xlu0 %1109
        %1111 = vrot.lane.b32.xlu0 %v1015, 8
        %v1112 = vpop.permute.xlu0 %1111
        %1113 = vrot.lane.b32.xlu0 %v1016, 8
        %v1114 = vpop.permute.xlu0 %1113
        %vm1131 = vcmask 31744
        %v1132 = vsel %vm1131, %v997, %v1034
        %v1133 = vsel %vm1131, %v998, %v1036
        %v1134 = vsel %vm1131, %v999, %v1038
        %v1135 = vsel %vm1131, %v1000, %v1040
        %v1136 = vsel %vm1131, %v1001, %v1042
        %v1137 = vsel %vm1131, %v1002, %v1044
        %v1138 = vsel %vm1131, %v1003, %v1046
        %v1139 = vsel %vm1131, %v1004, %v1048
        %v1140 = vsel %vm1131, %v1005, %v1050
        %v1141 = vsel %vm1131, %v1006, %v1052
        %v1142 = vsel %vm1131, %v1007, %v1054
        %v1143 = vsel %vm1131, %v1008, %v1056
        %v1144 = vsel %vm1131, %v1009, %v1058
        %v1145 = vsel %vm1131, %v1010, %v1060
        %v1146 = vsel %vm1131, %v1011, %v1062
        %v1147 = vsel %vm1131, %v1012, %v1064
        %v1148 = vsel %vm462, %v1132, %v1084
        %v1149 = vsel %vm462, %v1133, %v1086
        %v1150 = vsel %vm462, %v1134, %v1088
        %v1151 = vsel %vm462, %v1135, %v1090
        %v1152 = vsel %vm462, %v1136, %v1092
        %v1153 = vsel %vm462, %v1137, %v1094
        %v1154 = vsel %vm462, %v1138, %v1096
        %v1155 = vsel %vm462, %v1139, %v1098
        %v1156 = vsel %vm462, %v1140, %v1100
        %v1157 = vsel %vm462, %v1141, %v1102
        %v1158 = vsel %vm462, %v1142, %v1104
        %v1159 = vsel %vm462, %v1143, %v1106
        %v1160 = vsel %vm462, %v1144, %v1108
        %v1161 = vsel %vm462, %v1145, %v1110
        %v1162 = vsel %vm462, %v1146, %v1112
        %v1163 = vsel %vm462, %v1147, %v1114
        %v1164 = vld [vmem:[%s5] sm:$0xff]
        %v1165 = vld [vmem:[%s5 + $0x8] sm:$0xf]
        %vm1166 = vcmask 97280
        %v1168 = vsel %vm1166, %v1148, 0
        %v1171 = vsel %vm1166, %v1149, 0
        %v1174 = vsel %vm1166, %v1150, 0
        %v1177 = vsel %vm1166, %v1151, 0
        %v1180 = vsel %vm1166, %v1152, 0
        %v1183 = vsel %vm1166, %v1153, 0
        %v1186 = vsel %vm1166, %v1154, 0
        %v1189 = vsel %vm1166, %v1155, 0
        %v1192 = vsel %vm1166, %v1156, 0
        %v1195 = vsel %vm1166, %v1157, 0
        %v1198 = vsel %vm1166, %v1158, 0
        %v1201 = vsel %vm1166, %v1159, 0
        %v1204 = vsel %vm1166, %v1160, 0
        %v1207 = vsel %vm1166, %v1161, 0
        %v1210 = vsel %vm1166, %v1162, 0
        %v1213 = vsel %vm1166, %v1163, 0
        %vm1215 = vcmask 1043456
        %v1217 = vsel %vm1215, %v1165, 0
        %1219 = vmatprep.subr.mxu0 0.0
        %1220 = vmatpush1.msra.mxu0 0.0
        %1221 = vmatprep.subr.mxu0 0.0
        %1222 = vmatpush1.msra.mxu0 0.0
        %1223 = vmatprep.subr.mxu0 0.0
        %1224 = vmatpush1.msra.mxu0 0.0
        %1225 = vmatprep.subr.mxu0 0.0
        %1226 = vmatpush1.msra.mxu0 0.0
        %1227 = vmatprep.subr.mxu0 0.0
        %1228 = vmatpush1.msra.mxu0 0.0
        %1229 = vmatprep.subr.mxu0 0.0
        %1230 = vmatpush1.msra.mxu0 0.0
        %1231 = vmatprep.subr.mxu0 0.0
        %1232 = vmatpush1.msra.mxu0 0.0
        %1233 = vmatprep.subr.mxu0 0.0
        %1234 = vmatpush1.msra.mxu0 0.0
        %1235 = vmatprep.subr.mxu0 0.0
        %1236 = vmatpush1.msra.mxu0 0.0
        %1237 = vmatprep.subr.mxu0 0.0
        %1238 = vmatpush1.msra.mxu0 0.0
        %1239 = vmatprep.subr.mxu0 0.0
        %1240 = vmatpush1.msra.mxu0 0.0
        %1241 = vmatprep.subr.mxu0 0.0
        %1242 = vmatpush1.msra.mxu0 0.0
        %1243 = vmatprep.subr.mxu0 0.0
        %1244 = vmatpush1.msra.mxu0 0.0
        %1245 = vmatprep.subr.mxu0 0.0
        %1246 = vmatpush1.msra.mxu0 0.0
        %1247 = vmatprep.subr.mxu0 0.0
        %1248 = vmatpush1.msra.mxu0 %v1217
        %1249 = vmatprep.subr.mxu0 0.0
        %1250 = vmatpush1.msra.mxu0 %v1164
        %1251 = vmatprep.subr.mxu0 0.0
        %1252 = vmatpush2.msra.mxu0 0.0
        %1253 = vmatprep.subr.mxu0 0.0
        %1254 = vmatpush2.msra.mxu0 0.0
        %1255 = vmatprep.subr.mxu0 0.0
        %1256 = vmatpush2.msra.mxu0 0.0
        %1257 = vmatprep.subr.mxu0 0.0
        %1258 = vmatpush2.msra.mxu0 0.0
        %1259 = vmatprep.subr.mxu0 0.0
        %1260 = vmatpush2.msra.mxu0 0.0
        %1261 = vmatprep.subr.mxu0 0.0
        %1262 = vmatpush2.msra.mxu0 0.0
        %1263 = vmatprep.subr.mxu0 0.0
        %1264 = vmatpush2.msra.mxu0 0.0
        %1265 = vmatprep.subr.mxu0 0.0
        %1266 = vmatpush2.msra.mxu0 0.0
        %1267 = vmatprep.subr.mxu0 0.0
        %1268 = vmatpush2.msra.mxu0 0.0
        %1269 = vmatprep.subr.mxu0 0.0
        %1270 = vmatpush2.msra.mxu0 0.0
        %1271 = vmatprep.subr.mxu0 0.0
        %1272 = vmatpush2.msra.mxu0 0.0
        %1273 = vmatprep.subr.mxu0 0.0
        %1274 = vmatpush2.msra.mxu0 0.0
        %1275 = vmatprep.subr.mxu0 0.0
        %1276 = vmatpush2.msra.mxu0 0.0
        %1277 = vmatprep.subr.mxu0 0.0
        %1278 = vmatpush2.msra.mxu0 0.0
        %1279 = vmatprep.subr.mxu0 0.0
        %1280 = vmatpush2.msra.mxu0 0.0
        %1281 = vmatprep.subr.mxu0 0.0
        %1282 = vmatpush2.msra.mxu0 0.0
        %1283 = vmatprep.mubr.f32.mxu0 0.0
        %1284 = vmatmul.mubr.f32.gmra.mxu0 %v1168
        %v1285 = vpop.f32.mrf.mxu0
        %v1286 = vadd.f32 0.0, %v1285
        %v1287 = vpop.f32.mrf.mxu0
        %1288 = vmatprep.mubr.f32.mxu0 0.0
        %1289 = vmatmul.mubr.f32.gmra.mxu0 %v1171
        %v1290 = vpop.f32.mrf.mxu0
        %v1291 = vadd.f32 0.0, %v1290
        %v1292 = vpop.f32.mrf.mxu0
        %1293 = vmatprep.mubr.f32.mxu0 0.0
        %1294 = vmatmul.mubr.f32.gmra.mxu0 %v1174
        %v1295 = vpop.f32.mrf.mxu0
        %v1296 = vadd.f32 0.0, %v1295
        %v1297 = vpop.f32.mrf.mxu0
        %1298 = vmatprep.mubr.f32.mxu0 0.0
        %1299 = vmatmul.mubr.f32.gmra.mxu0 %v1177
        %v1300 = vpop.f32.mrf.mxu0
        %v1301 = vadd.f32 0.0, %v1300
        %v1302 = vpop.f32.mrf.mxu0
        %1303 = vmatprep.mubr.f32.mxu0 0.0
        %1304 = vmatmul.mubr.f32.gmra.mxu0 %v1180
        %v1305 = vpop.f32.mrf.mxu0
        %v1306 = vadd.f32 0.0, %v1305
        %v1307 = vpop.f32.mrf.mxu0
        %1308 = vmatprep.mubr.f32.mxu0 0.0
        %1309 = vmatmul.mubr.f32.gmra.mxu0 %v1183
        %v1310 = vpop.f32.mrf.mxu0
        %v1311 = vadd.f32 0.0, %v1310
        %v1312 = vpop.f32.mrf.mxu0
        %1313 = vmatprep.mubr.f32.mxu0 0.0
        %1314 = vmatmul.mubr.f32.gmra.mxu0 %v1186
        %v1315 = vpop.f32.mrf.mxu0
        %v1316 = vadd.f32 0.0, %v1315
        %v1317 = vpop.f32.mrf.mxu0
        %1318 = vmatprep.mubr.f32.mxu0 0.0
        %1319 = vmatmul.mubr.f32.gmra.mxu0 %v1189
        %v1320 = vpop.f32.mrf.mxu0
        %v1321 = vadd.f32 0.0, %v1320
        %v1322 = vpop.f32.mrf.mxu0
        %1323 = vmatprep.mubr.f32.mxu0 0.0
        %1324 = vmatmul.mubr.f32.gmra.mxu0 %v1192
        %v1325 = vpop.f32.mrf.mxu0
        %v1326 = vadd.f32 0.0, %v1325
        %v1327 = vpop.f32.mrf.mxu0
        %1328 = vmatprep.mubr.f32.mxu0 0.0
        %1329 = vmatmul.mubr.f32.gmra.mxu0 %v1195
        %v1330 = vpop.f32.mrf.mxu0
        %v1331 = vadd.f32 0.0, %v1330
        %v1332 = vpop.f32.mrf.mxu0
        %1333 = vmatprep.mubr.f32.mxu0 0.0
        %1334 = vmatmul.mubr.f32.gmra.mxu0 %v1198
        %v1335 = vpop.f32.mrf.mxu0
        %v1336 = vadd.f32 0.0, %v1335
        %v1337 = vpop.f32.mrf.mxu0
        %1338 = vmatprep.mubr.f32.mxu0 0.0
        %1339 = vmatmul.mubr.f32.gmra.mxu0 %v1201
        %v1340 = vpop.f32.mrf.mxu0
        %v1341 = vadd.f32 0.0, %v1340
        %v1342 = vpop.f32.mrf.mxu0
        %1343 = vmatprep.mubr.f32.mxu0 0.0
        %1344 = vmatmul.mubr.f32.gmra.mxu0 %v1204
        %v1345 = vpop.f32.mrf.mxu0
        %v1346 = vadd.f32 0.0, %v1345
        %v1347 = vpop.f32.mrf.mxu0
        %1348 = vmatprep.mubr.f32.mxu0 0.0
        %1349 = vmatmul.mubr.f32.gmra.mxu0 %v1207
        %v1350 = vpop.f32.mrf.mxu0
        %v1351 = vadd.f32 0.0, %v1350
        %v1352 = vpop.f32.mrf.mxu0
        %1353 = vmatprep.mubr.f32.mxu0 0.0
        %1354 = vmatmul.mubr.f32.gmra.mxu0 %v1210
        %v1355 = vpop.f32.mrf.mxu0
        %v1356 = vadd.f32 0.0, %v1355
        %v1357 = vpop.f32.mrf.mxu0
        %1358 = vmatprep.mubr.f32.mxu0 0.0
        %1359 = vmatmul.mubr.f32.gmra.mxu0 %v1213
        %v1360 = vpop.f32.mrf.mxu0
        %v1361 = vadd.f32 0.0, %v1360
        %v1362 = vpop.f32.mrf.mxu0
        %1363 = vdwg.mxu0
        %vm1380 = vcmask 1040384
        %v1381 = vrot.slane %v1286, 7
        %v1382 = vrot.slane %v1291, 7
        %v1383 = vsel %vm1380, %v1381, %v1382
        %v1384 = vrot.slane %v1296, 7
        %v1385 = vrot.slane %v1301, 7
        %v1386 = vsel %vm1380, %v1384, %v1385
        %v1387 = vrot.slane %v1306, 7
        %v1388 = vrot.slane %v1311, 7
        %v1389 = vsel %vm1380, %v1387, %v1388
        %v1390 = vrot.slane %v1316, 7
        %v1391 = vrot.slane %v1321, 7
        %v1392 = vsel %vm1380, %v1390, %v1391
        %v1393 = vrot.slane %v1326, 7
        %v1394 = vrot.slane %v1331, 7
        %v1395 = vsel %vm1380, %v1393, %v1394
        %v1396 = vrot.slane %v1336, 7
        %v1397 = vrot.slane %v1341, 7
        %v1398 = vsel %vm1380, %v1396, %v1397
        %v1399 = vrot.slane %v1346, 7
        %v1400 = vrot.slane %v1351, 7
        %v1401 = vsel %vm1380, %v1399, %v1400
        %v1402 = vrot.slane %v1356, 7
        %v1403 = vrot.slane %v1361, 7
        %v1404 = vsel %vm1380, %v1402, %v1403
        %v1413 = vsel %vm1380, 0.0, %v1381
        %v1414 = vsel %vm1380, 0.0, %v1384
        %v1415 = vsel %vm1380, 0.0, %v1387
        %v1416 = vsel %vm1380, 0.0, %v1390
        %v1417 = vsel %vm1380, 0.0, %v1393
        %v1418 = vsel %vm1380, 0.0, %v1396
        %v1419 = vsel %vm1380, 0.0, %v1399
        %v1420 = vsel %vm1380, 0.0, %v1402
        %vm1421 = vcmask 1046528
        %v1422 = vrot.slane %v1286, 1
        %v1423 = vrot.slane %v1291, 1
        %v1424 = vsel %vm1421, %v1422, %v1423
        %v1425 = vrot.slane %v1296, 1
        %v1426 = vrot.slane %v1301, 1
        %v1427 = vsel %vm1421, %v1425, %v1426
        %v1428 = vrot.slane %v1306, 1
        %v1429 = vrot.slane %v1311, 1
        %v1430 = vsel %vm1421, %v1428, %v1429
        %v1431 = vrot.slane %v1316, 1
        %v1432 = vrot.slane %v1321, 1
        %v1433 = vsel %vm1421, %v1431, %v1432
        %v1434 = vrot.slane %v1326, 1
        %v1435 = vrot.slane %v1331, 1
        %v1436 = vsel %vm1421, %v1434, %v1435
        %v1437 = vrot.slane %v1336, 1
        %v1438 = vrot.slane %v1341, 1
        %v1439 = vsel %vm1421, %v1437, %v1438
        %v1440 = vrot.slane %v1346, 1
        %v1441 = vrot.slane %v1351, 1
        %v1442 = vsel %vm1421, %v1440, %v1441
        %v1443 = vrot.slane %v1356, 1
        %v1444 = vrot.slane %v1361, 1
        %v1445 = vsel %vm1421, %v1443, %v1444
        %v1454 = vsel %vm1421, %v1423, 0.0
        %v1455 = vsel %vm1421, %v1426, 0.0
        %v1456 = vsel %vm1421, %v1429, 0.0
        %v1457 = vsel %vm1421, %v1432, 0.0
        %v1458 = vsel %vm1421, %v1435, 0.0
        %v1459 = vsel %vm1421, %v1438, 0.0
        %v1460 = vsel %vm1421, %v1441, 0.0
        %v1461 = vsel %vm1421, %v1444, 0.0
        %1470 = vrot.lane.b32.xlu0 %v1413, 8
        %v1471 = vpop.permute.xlu0 %1470
        %1472 = vrot.lane.b32.xlu0 %v1383, 8
        %v1473 = vpop.permute.xlu0 %1472
        %1474 = vrot.lane.b32.xlu0 %v1414, 8
        %v1475 = vpop.permute.xlu0 %1474
        %1476 = vrot.lane.b32.xlu0 %v1386, 8
        %v1477 = vpop.permute.xlu0 %1476
        %1478 = vrot.lane.b32.xlu0 %v1415, 8
        %v1479 = vpop.permute.xlu0 %1478
        %1480 = vrot.lane.b32.xlu0 %v1389, 8
        %v1481 = vpop.permute.xlu0 %1480
        %1482 = vrot.lane.b32.xlu0 %v1416, 8
        %v1483 = vpop.permute.xlu0 %1482
        %1484 = vrot.lane.b32.xlu0 %v1392, 8
        %v1485 = vpop.permute.xlu0 %1484
        %1486 = vrot.lane.b32.xlu0 %v1417, 8
        %v1487 = vpop.permute.xlu0 %1486
        %1488 = vrot.lane.b32.xlu0 %v1395, 8
        %v1489 = vpop.permute.xlu0 %1488
        %1490 = vrot.lane.b32.xlu0 %v1418, 8
        %v1491 = vpop.permute.xlu0 %1490
        %1492 = vrot.lane.b32.xlu0 %v1398, 8
        %v1493 = vpop.permute.xlu0 %1492
        %1494 = vrot.lane.b32.xlu0 %v1419, 8
        %v1495 = vpop.permute.xlu0 %1494
        %1496 = vrot.lane.b32.xlu0 %v1401, 8
        %v1497 = vpop.permute.xlu0 %1496
        %1498 = vrot.lane.b32.xlu0 %v1420, 8
        %v1499 = vpop.permute.xlu0 %1498
        %1500 = vrot.lane.b32.xlu0 %v1404, 8
        %v1501 = vpop.permute.xlu0 %1500
        %v1518 = vadd.f32 %v1286, %v1471
        %v1519 = vadd.f32 %v1291, %v1473
        %v1520 = vadd.f32 %v1296, %v1475
        %v1521 = vadd.f32 %v1301, %v1477
        %v1522 = vadd.f32 %v1306, %v1479
        %v1523 = vadd.f32 %v1311, %v1481
        %v1524 = vadd.f32 %v1316, %v1483
        %v1525 = vadd.f32 %v1321, %v1485
        %v1526 = vadd.f32 %v1326, %v1487
        %v1527 = vadd.f32 %v1331, %v1489
        %v1528 = vadd.f32 %v1336, %v1491
        %v1529 = vadd.f32 %v1341, %v1493
        %v1530 = vadd.f32 %v1346, %v1495
        %v1531 = vadd.f32 %v1351, %v1497
        %v1532 = vadd.f32 %v1356, %v1499
        %v1533 = vadd.f32 %v1361, %v1501
        %1542 = vrot.lane.b32.xlu0 %v1424, 120
        %v1543 = vpop.permute.xlu0 %1542
        %1544 = vrot.lane.b32.xlu0 %v1454, 120
        %v1545 = vpop.permute.xlu0 %1544
        %1546 = vrot.lane.b32.xlu0 %v1427, 120
        %v1547 = vpop.permute.xlu0 %1546
        %1548 = vrot.lane.b32.xlu0 %v1455, 120
        %v1549 = vpop.permute.xlu0 %1548
        %1550 = vrot.lane.b32.xlu0 %v1430, 120
        %v1551 = vpop.permute.xlu0 %1550
        %1552 = vrot.lane.b32.xlu0 %v1456, 120
        %v1553 = vpop.permute.xlu0 %1552
        %1554 = vrot.lane.b32.xlu0 %v1433, 120
        %v1555 = vpop.permute.xlu0 %1554
        %1556 = vrot.lane.b32.xlu0 %v1457, 120
        %v1557 = vpop.permute.xlu0 %1556
        %1558 = vrot.lane.b32.xlu0 %v1436, 120
        %v1559 = vpop.permute.xlu0 %1558
        %1560 = vrot.lane.b32.xlu0 %v1458, 120
        %v1561 = vpop.permute.xlu0 %1560
        %1562 = vrot.lane.b32.xlu0 %v1439, 120
        %v1563 = vpop.permute.xlu0 %1562
        %1564 = vrot.lane.b32.xlu0 %v1459, 120
        %v1565 = vpop.permute.xlu0 %1564
        %1566 = vrot.lane.b32.xlu0 %v1442, 120
        %v1567 = vpop.permute.xlu0 %1566
        %1568 = vrot.lane.b32.xlu0 %v1460, 120
        %v1569 = vpop.permute.xlu0 %1568
        %1570 = vrot.lane.b32.xlu0 %v1445, 120
        %v1571 = vpop.permute.xlu0 %1570
        %1572 = vrot.lane.b32.xlu0 %v1461, 120
        %v1573 = vpop.permute.xlu0 %1572
        %v1590 = vadd.f32 %v1518, %v1543
        %v1591 = vadd.f32 %v1519, %v1545
        %v1592 = vadd.f32 %v1520, %v1547
        %v1593 = vadd.f32 %v1521, %v1549
        %v1594 = vadd.f32 %v1522, %v1551
        %v1595 = vadd.f32 %v1523, %v1553
        %v1596 = vadd.f32 %v1524, %v1555
        %v1597 = vadd.f32 %v1525, %v1557
        %v1598 = vadd.f32 %v1526, %v1559
        %v1599 = vadd.f32 %v1527, %v1561
        %v1600 = vadd.f32 %v1528, %v1563
        %v1601 = vadd.f32 %v1529, %v1565
        %v1602 = vadd.f32 %v1530, %v1567
        %v1603 = vadd.f32 %v1531, %v1569
        %v1604 = vadd.f32 %v1532, %v1571
        %v1605 = vadd.f32 %v1533, %v1573
        %v1606 = vld [vmem:[%s6] sm:$0x1]
        %v1608 = vlaneseq
        %v1609 = vshrl.u32 %v1608, 7
        %v1610 = vsub.s32 0, %v1609
        %v1611 = vrot.slane %v1606, %v1610
        %1612 = vrot.lane.b32.xlu0 %v1611, 8
        %v1613 = vpop.permute.xlu0 %1612
        %v1615 = vadd.f32 %v1590, %v1613
        %v1616 = vadd.f32 %v1591, %v1613
        %v1617 = vadd.f32 %v1592, %v1613
        %v1618 = vadd.f32 %v1593, %v1613
        %v1619 = vadd.f32 %v1594, %v1613
        %v1620 = vadd.f32 %v1595, %v1613
        %v1621 = vadd.f32 %v1596, %v1613
        %v1622 = vadd.f32 %v1597, %v1613
        %v1623 = vadd.f32 %v1598, %v1613
        %v1624 = vadd.f32 %v1599, %v1613
        %v1625 = vadd.f32 %v1600, %v1613
        %v1626 = vadd.f32 %v1601, %v1613
        %v1627 = vadd.f32 %v1602, %v1613
        %v1628 = vadd.f32 %v1603, %v1613
        %v1629 = vadd.f32 %v1604, %v1613
        %v1630 = vadd.f32 %v1605, %v1613
        %v1631 = vxor.u32 %v1615, 2147483648
        %v1632 = vxor.u32 %v1616, 2147483648
        %v1633 = vxor.u32 %v1617, 2147483648
        %v1634 = vxor.u32 %v1618, 2147483648
        %v1635 = vxor.u32 %v1619, 2147483648
        %v1636 = vxor.u32 %v1620, 2147483648
        %v1637 = vxor.u32 %v1621, 2147483648
        %v1638 = vxor.u32 %v1622, 2147483648
        %v1639 = vxor.u32 %v1623, 2147483648
        %v1640 = vxor.u32 %v1624, 2147483648
        %v1641 = vxor.u32 %v1625, 2147483648
        %v1642 = vxor.u32 %v1626, 2147483648
        %v1643 = vxor.u32 %v1627, 2147483648
        %v1644 = vxor.u32 %v1628, 2147483648
        %v1645 = vxor.u32 %v1629, 2147483648
        %v1646 = vxor.u32 %v1630, 2147483648
        %v1647 = vmul.f32 %v1631, 1.442695
        %v1648 = vpow.pop %v1647
        %v1649 = vmul.f32 %v1632, 1.442695
        %v1650 = vpow.pop %v1649
        %v1651 = vmul.f32 %v1633, 1.442695
        %v1652 = vpow.pop %v1651
        %v1653 = vmul.f32 %v1634, 1.442695
        %v1654 = vpow.pop %v1653
        %v1655 = vmul.f32 %v1635, 1.442695
        %v1656 = vpow.pop %v1655
        %v1657 = vmul.f32 %v1636, 1.442695
        %v1658 = vpow.pop %v1657
        %v1659 = vmul.f32 %v1637, 1.442695
        %v1660 = vpow.pop %v1659
        %v1661 = vmul.f32 %v1638, 1.442695
        %v1662 = vpow.pop %v1661
        %v1663 = vmul.f32 %v1639, 1.442695
        %v1664 = vpow.pop %v1663
        %v1665 = vmul.f32 %v1640, 1.442695
        %v1666 = vpow.pop %v1665
        %v1667 = vmul.f32 %v1641, 1.442695
        %v1668 = vpow.pop %v1667
        %v1669 = vmul.f32 %v1642, 1.442695
        %v1670 = vpow.pop %v1669
        %v1671 = vmul.f32 %v1643, 1.442695
        %v1672 = vpow.pop %v1671
        %v1673 = vmul.f32 %v1644, 1.442695
        %v1674 = vpow.pop %v1673
        %v1675 = vmul.f32 %v1645, 1.442695
        %v1676 = vpow.pop %v1675
        %v1677 = vmul.f32 %v1646, 1.442695
        %v1678 = vpow.pop %v1677
        %v1679 = vadd.f32 %v1648, 1.0
        %v1680 = vadd.f32 %v1650, 1.0
        %v1681 = vadd.f32 %v1652, 1.0
        %v1682 = vadd.f32 %v1654, 1.0
        %v1683 = vadd.f32 %v1656, 1.0
        %v1684 = vadd.f32 %v1658, 1.0
        %v1685 = vadd.f32 %v1660, 1.0
        %v1686 = vadd.f32 %v1662, 1.0
        %v1687 = vadd.f32 %v1664, 1.0
        %v1688 = vadd.f32 %v1666, 1.0
        %v1689 = vadd.f32 %v1668, 1.0
        %v1690 = vadd.f32 %v1670, 1.0
        %v1691 = vadd.f32 %v1672, 1.0
        %v1692 = vadd.f32 %v1674, 1.0
        %v1693 = vadd.f32 %v1676, 1.0
        %v1694 = vadd.f32 %v1678, 1.0
        %v1695 = vrcp.pop %v1679
        %v1696 = vmul.f32 1.0, %v1695
        %v1697 = vrcp.pop %v1680
        %v1698 = vmul.f32 1.0, %v1697
        %v1699 = vrcp.pop %v1681
        %v1700 = vmul.f32 1.0, %v1699
        %v1701 = vrcp.pop %v1682
        %v1702 = vmul.f32 1.0, %v1701
        %v1703 = vrcp.pop %v1683
        %v1704 = vmul.f32 1.0, %v1703
        %v1705 = vrcp.pop %v1684
        %v1706 = vmul.f32 1.0, %v1705
        %v1707 = vrcp.pop %v1685
        %v1708 = vmul.f32 1.0, %v1707
        %v1709 = vrcp.pop %v1686
        %v1710 = vmul.f32 1.0, %v1709
        %v1711 = vrcp.pop %v1687
        %v1712 = vmul.f32 1.0, %v1711
        %v1713 = vrcp.pop %v1688
        %v1714 = vmul.f32 1.0, %v1713
        %v1715 = vrcp.pop %v1689
        %v1716 = vmul.f32 1.0, %v1715
        %v1717 = vrcp.pop %v1690
        %v1718 = vmul.f32 1.0, %v1717
        %v1719 = vrcp.pop %v1691
        %v1720 = vmul.f32 1.0, %v1719
        %v1721 = vrcp.pop %v1692
        %v1722 = vmul.f32 1.0, %v1721
        %v1723 = vrcp.pop %v1693
        %v1724 = vmul.f32 1.0, %v1723
        %v1725 = vrcp.pop %v1694
        %v1726 = vmul.f32 1.0, %v1725
        %v1727 = vmul.f32 %v1615, %v1696
        %v1728 = vmul.f32 %v1616, %v1698
        %v1729 = vmul.f32 %v1617, %v1700
        %v1730 = vmul.f32 %v1618, %v1702
        %v1731 = vmul.f32 %v1619, %v1704
        %v1732 = vmul.f32 %v1620, %v1706
        %v1733 = vmul.f32 %v1621, %v1708
        %v1734 = vmul.f32 %v1622, %v1710
        %v1735 = vmul.f32 %v1623, %v1712
        %v1736 = vmul.f32 %v1624, %v1714
        %v1737 = vmul.f32 %v1625, %v1716
        %v1738 = vmul.f32 %v1626, %v1718
        %v1739 = vmul.f32 %v1627, %v1720
        %v1740 = vmul.f32 %v1628, %v1722
        %v1741 = vmul.f32 %v1629, %v1724
        %v1742 = vmul.f32 %v1630, %v1726
        %1743 = vrot.lane.b32.xlu0 %v436, 8
        %v1744 = vpop.permute.xlu0 %1743
        %1745 = vrot.lane.b32.xlu0 %v437, 8
        %v1746 = vpop.permute.xlu0 %1745
        %1747 = vrot.lane.b32.xlu0 %v438, 8
        %v1748 = vpop.permute.xlu0 %1747
        %1749 = vrot.lane.b32.xlu0 %v439, 8
        %v1750 = vpop.permute.xlu0 %1749
        %1751 = vrot.lane.b32.xlu0 %v440, 8
        %v1752 = vpop.permute.xlu0 %1751
        %1753 = vrot.lane.b32.xlu0 %v441, 8
        %v1754 = vpop.permute.xlu0 %1753
        %1755 = vrot.lane.b32.xlu0 %v442, 8
        %v1756 = vpop.permute.xlu0 %1755
        %1757 = vrot.lane.b32.xlu0 %v443, 8
        %v1758 = vpop.permute.xlu0 %1757
        %1759 = vrot.lane.b32.xlu0 %v444, 8
        %v1760 = vpop.permute.xlu0 %1759
        %1761 = vrot.lane.b32.xlu0 %v445, 8
        %v1762 = vpop.permute.xlu0 %1761
        %1763 = vrot.lane.b32.xlu0 %v446, 8
        %v1764 = vpop.permute.xlu0 %1763
        %1765 = vrot.lane.b32.xlu0 %v447, 8
        %v1766 = vpop.permute.xlu0 %1765
        %1767 = vrot.lane.b32.xlu0 %v448, 8
        %v1768 = vpop.permute.xlu0 %1767
        %1769 = vrot.lane.b32.xlu0 %v449, 8
        %v1770 = vpop.permute.xlu0 %1769
        %1771 = vrot.lane.b32.xlu0 %v450, 8
        %v1772 = vpop.permute.xlu0 %1771
        %1773 = vrot.lane.b32.xlu0 %v451, 8
        %v1774 = vpop.permute.xlu0 %1773
        %v1791 = vadd.f32 %v1727, %v1744
        %v1792 = vadd.f32 %v1728, %v1746
        %v1793 = vadd.f32 %v1729, %v1748
        %v1794 = vadd.f32 %v1730, %v1750
        %v1795 = vadd.f32 %v1731, %v1752
        %v1796 = vadd.f32 %v1732, %v1754
        %v1797 = vadd.f32 %v1733, %v1756
        %v1798 = vadd.f32 %v1734, %v1758
        %v1799 = vadd.f32 %v1735, %v1760
        %v1800 = vadd.f32 %v1736, %v1762
        %v1801 = vadd.f32 %v1737, %v1764
        %v1802 = vadd.f32 %v1738, %v1766
        %v1803 = vadd.f32 %v1739, %v1768
        %v1804 = vadd.f32 %v1740, %v1770
        %v1805 = vadd.f32 %v1741, %v1772
        %v1806 = vadd.f32 %v1742, %v1774
        %v1815 = vrot.slane %v1793, 7
        %vm1816 = vcmask 1041409
        %v1817 = vsel %vm1816, %v1815, %v1791
        %v1818 = vrot.slane %v1795, 6
        %vm1819 = vcmask 1042434
        %v1820 = vsel %vm1819, %v1818, %v1817
        %v1821 = vrot.slane %v1797, 5
        %vm1822 = vcmask 1043459
        %v1823 = vsel %vm1822, %v1821, %v1820
        %v1824 = vrot.slane %v1799, 4
        %vm1825 = vcmask 1044484
        %v1826 = vsel %vm1825, %v1824, %v1823
        %v1827 = vrot.slane %v1801, 3
        %vm1828 = vcmask 1045509
        %v1829 = vsel %vm1828, %v1827, %v1826
        %v1830 = vrot.slane %v1803, 2
        %vm1831 = vcmask 1046534
        %v1832 = vsel %vm1831, %v1830, %v1829
        %v1833 = vrot.slane %v1805, 1
        %vm1834 = vcmask 1047559
        %v1835 = vsel %vm1834, %v1833, %v1832
        %1836 = vrot.lane.b32.xlu0 %v1835, 120
        %v1837 = vpop.permute.xlu0 %1836
        %v1839 = vrot.slane %v1791, 1
        %v1840 = vsel %vm1816, %v1793, %v1839
        %v1841 = vrot.slane %v1795, 7
        %v1842 = vsel %vm1819, %v1841, %v1840
        %v1843 = vrot.slane %v1797, 6
        %v1844 = vsel %vm1822, %v1843, %v1842
        %v1845 = vrot.slane %v1799, 5
        %v1846 = vsel %vm1825, %v1845, %v1844
        %v1847 = vrot.slane %v1801, 4
        %v1848 = vsel %vm1828, %v1847, %v1846
        %v1849 = vrot.slane %v1803, 3
        %v1850 = vsel %vm1831, %v1849, %v1848
        %v1851 = vrot.slane %v1805, 2
        %v1852 = vsel %vm1834, %v1851, %v1850
        %v1854 = vrot.slane %v1791, 2
        %v1855 = vrot.slane %v1793, 1
        %v1856 = vsel %vm1816, %v1855, %v1854
        %v1857 = vsel %vm1819, %v1795, %v1856
        %v1858 = vrot.slane %v1797, 7
        %v1859 = vsel %vm1822, %v1858, %v1857
        %v1860 = vrot.slane %v1799, 6
        %v1861 = vsel %vm1825, %v1860, %v1859
        %v1862 = vrot.slane %v1801, 5
        %v1863 = vsel %vm1828, %v1862, %v1861
        %v1864 = vrot.slane %v1803, 4
        %v1865 = vsel %vm1831, %v1864, %v1863
        %v1866 = vrot.slane %v1805, 3
        %v1867 = vsel %vm1834, %v1866, %v1865
        %1868 = vrot.lane.b32.xlu0 %v1867, 8
        %v1869 = vpop.permute.xlu0 %1868
        %v1871 = vrot.slane %v1791, 3
        %v1872 = vrot.slane %v1793, 2
        %v1873 = vsel %vm1816, %v1872, %v1871
        %v1874 = vrot.slane %v1795, 1
        %v1875 = vsel %vm1819, %v1874, %v1873
        %v1876 = vsel %vm1822, %v1797, %v1875
        %v1877 = vrot.slane %v1799, 7
        %v1878 = vsel %vm1825, %v1877, %v1876
        %v1879 = vrot.slane %v1801, 6
        %v1880 = vsel %vm1828, %v1879, %v1878
        %v1881 = vrot.slane %v1803, 5
        %v1882 = vsel %vm1831, %v1881, %v1880
        %v1883 = vrot.slane %v1805, 4
        %v1884 = vsel %vm1834, %v1883, %v1882
        %1885 = vrot.lane.b32.xlu0 %v1884, 16
        %v1886 = vpop.permute.xlu0 %1885
        %v1888 = vrot.slane %v1791, 4
        %v1889 = vrot.slane %v1793, 3
        %v1890 = vsel %vm1816, %v1889, %v1888
        %v1891 = vrot.slane %v1795, 2
        %v1892 = vsel %vm1819, %v1891, %v1890
        %v1893 = vrot.slane %v1797, 1
        %v1894 = vsel %vm1822, %v1893, %v1892
        %v1895 = vsel %vm1825, %v1799, %v1894
        %v1896 = vrot.slane %v1801, 7
        %v1897 = vsel %vm1828, %v1896, %v1895
        %v1898 = vrot.slane %v1803, 6
        %v1899 = vsel %vm1831, %v1898, %v1897
        %v1900 = vrot.slane %v1805, 5
        %v1901 = vsel %vm1834, %v1900, %v1899
        %1902 = vrot.lane.b32.xlu0 %v1901, 24
        %v1903 = vpop.permute.xlu0 %1902
        %v1905 = vrot.slane %v1791, 5
        %v1906 = vrot.slane %v1793, 4
        %v1907 = vsel %vm1816, %v1906, %v1905
        %v1908 = vrot.slane %v1795, 3
        %v1909 = vsel %vm1819, %v1908, %v1907
        %v1910 = vrot.slane %v1797, 2
        %v1911 = vsel %vm1822, %v1910, %v1909
        %v1912 = vrot.slane %v1799, 1
        %v1913 = vsel %vm1825, %v1912, %v1911
        %v1914 = vsel %vm1828, %v1801, %v1913
        %v1915 = vrot.slane %v1803, 7
        %v1916 = vsel %vm1831, %v1915, %v1914
        %v1917 = vrot.slane %v1805, 6
        %v1918 = vsel %vm1834, %v1917, %v1916
        %1919 = vrot.lane.b32.xlu0 %v1918, 32
        %v1920 = vpop.permute.xlu0 %1919
        %v1922 = vrot.slane %v1791, 6
        %v1923 = vrot.slane %v1793, 5
        %v1924 = vsel %vm1816, %v1923, %v1922
        %v1925 = vrot.slane %v1795, 4
        %v1926 = vsel %vm1819, %v1925, %v1924
        %v1927 = vrot.slane %v1797, 3
        %v1928 = vsel %vm1822, %v1927, %v1926
        %v1929 = vrot.slane %v1799, 2
        %v1930 = vsel %vm1825, %v1929, %v1928
        %v1931 = vrot.slane %v1801, 1
        %v1932 = vsel %vm1828, %v1931, %v1930
        %v1933 = vsel %vm1831, %v1803, %v1932
        %v1934 = vrot.slane %v1805, 7
        %v1935 = vsel %vm1834, %v1934, %v1933
        %1936 = vrot.lane.b32.xlu0 %v1935, 40
        %v1937 = vpop.permute.xlu0 %1936
        %v1939 = vrot.slane %v1791, 7
        %v1940 = vrot.slane %v1793, 6
        %v1941 = vsel %vm1816, %v1940, %v1939
        %v1942 = vrot.slane %v1795, 5
        %v1943 = vsel %vm1819, %v1942, %v1941
        %v1944 = vrot.slane %v1797, 4
        %v1945 = vsel %vm1822, %v1944, %v1943
        %v1946 = vrot.slane %v1799, 3
        %v1947 = vsel %vm1825, %v1946, %v1945
        %v1948 = vrot.slane %v1801, 2
        %v1949 = vsel %vm1828, %v1948, %v1947
        %v1950 = vrot.slane %v1803, 1
        %v1951 = vsel %vm1831, %v1950, %v1949
        %v1952 = vsel %vm1834, %v1805, %v1951
        %1953 = vrot.lane.b32.xlu0 %v1952, 48
        %v1954 = vpop.permute.xlu0 %1953
        %v1964 = vrot.slane %v1794, 7
        %v1965 = vsel %vm1816, %v1964, %v1792
        %v1966 = vrot.slane %v1796, 6
        %v1967 = vsel %vm1819, %v1966, %v1965
        %v1968 = vrot.slane %v1798, 5
        %v1969 = vsel %vm1822, %v1968, %v1967
        %v1970 = vrot.slane %v1800, 4
        %v1971 = vsel %vm1825, %v1970, %v1969
        %v1972 = vrot.slane %v1802, 3
        %v1973 = vsel %vm1828, %v1972, %v1971
        %v1974 = vrot.slane %v1804, 2
        %v1975 = vsel %vm1831, %v1974, %v1973
        %v1976 = vrot.slane %v1806, 1
        %v1977 = vsel %vm1834, %v1976, %v1975
        %1978 = vrot.lane.b32.xlu0 %v1977, 56
        %v1979 = vpop.permute.xlu0 %1978
        %v1981 = vrot.slane %v1792, 1
        %v1982 = vsel %vm1816, %v1794, %v1981
        %v1983 = vrot.slane %v1796, 7
        %v1984 = vsel %vm1819, %v1983, %v1982
        %v1985 = vrot.slane %v1798, 6
        %v1986 = vsel %vm1822, %v1985, %v1984
        %v1987 = vrot.slane %v1800, 5
        %v1988 = vsel %vm1825, %v1987, %v1986
        %v1989 = vrot.slane %v1802, 4
        %v1990 = vsel %vm1828, %v1989, %v1988
        %v1991 = vrot.slane %v1804, 3
        %v1992 = vsel %vm1831, %v1991, %v1990
        %v1993 = vrot.slane %v1806, 2
        %v1994 = vsel %vm1834, %v1993, %v1992
        %1995 = vrot.lane.b32.xlu0 %v1994, 64
        %v1996 = vpop.permute.xlu0 %1995
        %v1998 = vrot.slane %v1792, 2
        %v1999 = vrot.slane %v1794, 1
        %v2000 = vsel %vm1816, %v1999, %v1998
        %v2001 = vsel %vm1819, %v1796, %v2000
        %v2002 = vrot.slane %v1798, 7
        %v2003 = vsel %vm1822, %v2002, %v2001
        %v2004 = vrot.slane %v1800, 6
        %v2005 = vsel %vm1825, %v2004, %v2003
        %v2006 = vrot.slane %v1802, 5
        %v2007 = vsel %vm1828, %v2006, %v2005
        %v2008 = vrot.slane %v1804, 4
        %v2009 = vsel %vm1831, %v2008, %v2007
        %v2010 = vrot.slane %v1806, 3
        %v2011 = vsel %vm1834, %v2010, %v2009
        %2012 = vrot.lane.b32.xlu0 %v2011, 72
        %v2013 = vpop.permute.xlu0 %2012
        %v2015 = vrot.slane %v1792, 3
        %v2016 = vrot.slane %v1794, 2
        %v2017 = vsel %vm1816, %v2016, %v2015
        %v2018 = vrot.slane %v1796, 1
        %v2019 = vsel %vm1819, %v2018, %v2017
        %v2020 = vsel %vm1822, %v1798, %v2019
        %v2021 = vrot.slane %v1800, 7
        %v2022 = vsel %vm1825, %v2021, %v2020
        %v2023 = vrot.slane %v1802, 6
        %v2024 = vsel %vm1828, %v2023, %v2022
        %v2025 = vrot.slane %v1804, 5
        %v2026 = vsel %vm1831, %v2025, %v2024
        %v2027 = vrot.slane %v1806, 4
        %v2028 = vsel %vm1834, %v2027, %v2026
        %2029 = vrot.lane.b32.xlu0 %v2028, 80
        %v2030 = vpop.permute.xlu0 %2029
        %v2032 = vrot.slane %v1792, 4
        %v2033 = vrot.slane %v1794, 3
        %v2034 = vsel %vm1816, %v2033, %v2032
        %v2035 = vrot.slane %v1796, 2
        %v2036 = vsel %vm1819, %v2035, %v2034
        %v2037 = vrot.slane %v1798, 1
        %v2038 = vsel %vm1822, %v2037, %v2036
        %v2039 = vsel %vm1825, %v1800, %v2038
        %v2040 = vrot.slane %v1802, 7
        %v2041 = vsel %vm1828, %v2040, %v2039
        %v2042 = vrot.slane %v1804, 6
        %v2043 = vsel %vm1831, %v2042, %v2041
        %v2044 = vrot.slane %v1806, 5
        %v2045 = vsel %vm1834, %v2044, %v2043
        %2046 = vrot.lane.b32.xlu0 %v2045, 88
        %v2047 = vpop.permute.xlu0 %2046
        %v2049 = vrot.slane %v1792, 5
        %v2050 = vrot.slane %v1794, 4
        %v2051 = vsel %vm1816, %v2050, %v2049
        %v2052 = vrot.slane %v1796, 3
        %v2053 = vsel %vm1819, %v2052, %v2051
        %v2054 = vrot.slane %v1798, 2
        %v2055 = vsel %vm1822, %v2054, %v2053
        %v2056 = vrot.slane %v1800, 1
        %v2057 = vsel %vm1825, %v2056, %v2055
        %v2058 = vsel %vm1828, %v1802, %v2057
        %v2059 = vrot.slane %v1804, 7
        %v2060 = vsel %vm1831, %v2059, %v2058
        %v2061 = vrot.slane %v1806, 6
        %v2062 = vsel %vm1834, %v2061, %v2060
        %2063 = vrot.lane.b32.xlu0 %v2062, 96
        %v2064 = vpop.permute.xlu0 %2063
        %v2066 = vrot.slane %v1792, 6
        %v2067 = vrot.slane %v1794, 5
        %v2068 = vsel %vm1816, %v2067, %v2066
        %v2069 = vrot.slane %v1796, 4
        %v2070 = vsel %vm1819, %v2069, %v2068
        %v2071 = vrot.slane %v1798, 3
        %v2072 = vsel %vm1822, %v2071, %v2070
        %v2073 = vrot.slane %v1800, 2
        %v2074 = vsel %vm1825, %v2073, %v2072
        %v2075 = vrot.slane %v1802, 1
        %v2076 = vsel %vm1828, %v2075, %v2074
        %v2077 = vsel %vm1831, %v1804, %v2076
        %v2078 = vrot.slane %v1806, 7
        %v2079 = vsel %vm1834, %v2078, %v2077
        %2080 = vrot.lane.b32.xlu0 %v2079, 104
        %v2081 = vpop.permute.xlu0 %2080
        %v2083 = vrot.slane %v1792, 7
        %v2084 = vrot.slane %v1794, 6
        %v2085 = vsel %vm1816, %v2084, %v2083
        %v2086 = vrot.slane %v1796, 5
        %v2087 = vsel %vm1819, %v2086, %v2085
        %v2088 = vrot.slane %v1798, 4
        %v2089 = vsel %vm1822, %v2088, %v2087
        %v2090 = vrot.slane %v1800, 3
        %v2091 = vsel %vm1825, %v2090, %v2089
        %v2092 = vrot.slane %v1802, 2
        %v2093 = vsel %vm1828, %v2092, %v2091
        %v2094 = vrot.slane %v1804, 1
        %v2095 = vsel %vm1831, %v2094, %v2093
        %v2096 = vsel %vm1834, %v1806, %v2095
        %2097 = vrot.lane.b32.xlu0 %v2096, 112
        %v2098 = vpop.permute.xlu0 %2097
        %v2100 = vsel %vm462, %v1837, %v1852
        %vm2101 = vcmask 130048
        %v2102 = vsel %vm2101, %v2100, %v1869
        %vm2103 = vcmask 195584
        %v2104 = vsel %vm2103, %v2102, %v1886
        %vm2105 = vcmask 261120
        %v2106 = vsel %vm2105, %v2104, %v1903
        %vm2107 = vcmask 326656
        %v2108 = vsel %vm2107, %v2106, %v1920
        %vm2109 = vcmask 392192
        %v2110 = vsel %vm2109, %v2108, %v1937
        %vm2111 = vcmask 457728
        %v2112 = vsel %vm2111, %v2110, %v1954
        %vm2113 = vcmask 523264
        %v2114 = vsel %vm2113, %v2112, %v1979
        %vm2115 = vcmask 588800
        %v2116 = vsel %vm2115, %v2114, %v1996
        %vm2117 = vcmask 654336
        %v2118 = vsel %vm2117, %v2116, %v2013
        %vm2119 = vcmask 719872
        %v2120 = vsel %vm2119, %v2118, %v2030
        %vm2121 = vcmask 785408
        %v2122 = vsel %vm2121, %v2120, %v2047
        %vm2123 = vcmask 850944
        %v2124 = vsel %vm2123, %v2122, %v2064
        %vm2125 = vcmask 916480
        %v2126 = vsel %vm2125, %v2124, %v2081
        %vm2127 = vcmask 982016
        %v2128 = vsel %vm2127, %v2126, %v2098
        %2129 = vst [vmem:[%s388] sm:$0xff] %v2128
        %s2130 = sand.u32 %s227, 1
        %s2131 = scalar_lea.sflag [#allocation3], %s2130
        %s2132 = sand.u32 %s227, 1
        %s2133 = smul.addr %s2132, 8
        %s2134 = scalar_lea.vmem [#allocation2], %s2133
        // Predicated region
        $region49: #{tpu_custom_call.1} parent=47 // pred_check
          %p2135 = pneg %p237
        $region50: #{tpu_custom_call.1} parent=47 // pred_check_branch
          %2137 = sbr.rel (%p2135) target = $region52
        $region51: #{tpu_custom_call.1} parent=47 // pred_region
          %s2139 = ssub.s32 128, 128
          %2140 = vsyncadd %s2131, %s2139
          %s2141 = smul.addr %s25, 2
          %s2142 = sadd.s32 %s26, %s2141
          %s2143 = smul.addr %s2142, 128
          %s2144 = scalar_lea.hbm %s7, %s2143
          %s2146 = sshll.u32 %s2134, 4
          %s2147 = int_to_ptr.vmem [resolvable:$true] %s2146
          %2149 = dma.vmem_to_hbm [thread:$0]  %s2147, 128, %s2144, %s2131
        $region52: #{tpu_custom_call.1} parent=47 // pred_fallthru
          _
      $region48: #{tpu_custom_call.1} parent=5 // pred_fallthru
        _
      %p2150 = scmp.le.s32.totalorder 2, %s16
      // Predicated region
      $region53: #{tpu_custom_call.1} parent=5 // pred_check
        %p2151 = pneg %p2150
      $region54: #{tpu_custom_call.1} parent=5 // pred_check_branch
        %2153 = sbr.rel (%p2151) target = $region56
      $region55: #{tpu_custom_call.1} parent=5 // pred_region
        %s2154 = ssub.s32 %s16, 2
        // Predicated region
        $region57: #{tpu_custom_call.1} parent=55 // pred_check
          %p2155 = pneg %p243
        $region58: #{tpu_custom_call.1} parent=55 // pred_check_branch
          %2157 = sbr.rel (%p2155) target = $region60
        $region59: #{tpu_custom_call.1} parent=55 // pred_region
          %s2158 = sand.u32 %s228, 1
          %s2159 = scalar_lea.sflag [#allocation3], %s2158
          %s2160 = sand.u32 %s228, 1
          %s2161 = smul.addr %s2160, 8
          %s2162 = scalar_lea.vmem [#allocation2], %s2161
          %2163 = dma.done %s2159, 128
        $region60: #{tpu_custom_call.1} parent=55 // pred_fallthru
          _
      $region56: #{tpu_custom_call.1} parent=5 // pred_fallthru
        _
    $region6: #{tpu_custom_call.1} parent=1 // loop_footer
      %s20 = sadd.s32 1, %s16
    $region7: #{tpu_custom_call.1} parent=1 // loop_footer_branch
      %15 = sbr.rel target = $region3
    $region8: #{tpu_custom_call.1} parent=1 // loop_exit
      _
    %2164 = vsyncpa [#allocation3], 1
    %s2165 = scalar_lea.sflag [#allocation3], 1
    %2166 = vsyncpa %s2165, 1

</llo_original>
